<compile_context>
chip_gen: v6e
topology: v6e:2x2x1
jax: 0.10.0
libtpu: 0.0.40
codegen_flags: <defaults>
</compile_context>

<pallas_src>
import functools

import jax
import jax.numpy as jnp
from jax.experimental import pallas as pl
from jax.experimental.pallas import tpu as pltpu

_F32 = jnp.float32


# ------------------------------- fused kernel ------------------------------- #

def _encoder_layer_kernel(q_ref, k_ref, v_ref, m_ref,
                          wq_ref, wcat_ref, g1_ref, be1_ref,
                          w1_ref, b1_ref, w2_ref, b2_ref, g2_ref, be2_ref,
                          o_ref, *, h, d_head):
    """One batch element of EncoderLayer.forward, everything in VMEM."""
    q = q_ref[0].astype(_F32)          # (Lq, D)
    k = k_ref[0].astype(_F32)          # (Lk, D)  -- raw key (see module quirk)
    v = v_ref[0].astype(_F32)          # (Lk, D)  -- raw value
    msk = m_ref[0]                     # (Lq, Lk) int32, 1 == masked

    lq, d_model = q.shape
    neg_inf = jnp.float32(-jnp.inf)
    scale = jnp.float32(1.0 / (d_head ** 0.5))

    # --- multi-head attention (query projected; key/value raw, per reference) ---
    pq = jnp.dot(q, wq_ref[...].astype(_F32), preferred_element_type=_F32)   # (Lq, D)

    # Accumulate fc_concat directly:  ctx @ Wcat == sum_h ctx_h @ Wcat[h-rows].
    mha = jnp.zeros((lq, d_model), _F32)
    for i in range(h):                                   # static, small head count
        lo, hi = i * d_head, (i + 1) * d_head
        qh = pq[:, lo:hi]                                # (Lq, dh) static lane slice
        kh = k[:, lo:hi]                                 # (Lk, dh)
        vh = v[:, lo:hi]                                 # (Lk, dh)
        # scores = qh @ kh^T / sqrt(dh)   (contraction on last dims -> MXU)
        s = jax.lax.dot_general(qh, kh, (((1,), (1,)), ((), ())),
                                preferred_element_type=_F32) * scale          # (Lq, Lk)
        s = jnp.where(msk != 0, neg_inf, s)
        s = s - jnp.max(s, axis=-1, keepdims=True)
        p = jnp.exp(s)
        attn = p * pl.reciprocal(jnp.sum(p, axis=-1, keepdims=True), approx=True)
        ctx_h = jnp.dot(attn, vh, preferred_element_type=_F32)                # (Lq, dh)
        mha = mha + jnp.dot(ctx_h, wcat_ref[lo:hi, :].astype(_F32),
                            preferred_element_type=_F32)                      # (Lq, D)

    def layer_norm(x, gamma, beta):
        d = x.shape[-1]
        mean = jnp.mean(x, axis=-1, keepdims=True)
        xc = x - mean
        # torch.std default: Bessel-corrected (divide by d-1); eps added to std.
        std = jnp.sqrt(jnp.sum(xc * xc, axis=-1, keepdims=True) / jnp.float32(d - 1))
        return gamma * xc / (std + 1e-6) + beta

    # residual + layernorm 1   (dropout == identity in eval)
    x1 = layer_norm(q + mha, g1_ref[...].astype(_F32), be1_ref[...].astype(_F32))

    # --- position-wise feed forward ---
    hid = jnp.maximum(
        jnp.dot(x1, w1_ref[...].astype(_F32), preferred_element_type=_F32)
        + b1_ref[...].astype(_F32), 0.0)                                       # (Lq, d_ff)
    ff = (jnp.dot(hid, w2_ref[...].astype(_F32), preferred_element_type=_F32)
          + b2_ref[...].astype(_F32))                                          # (Lq, D)

    # residual + layernorm 2
    out = layer_norm(x1 + ff, g2_ref[...].astype(_F32), be2_ref[...].astype(_F32))
    o_ref[0] = out.astype(o_ref.dtype)


# ------------------------------ pallas wrapper ------------------------------ #

def encoder_layer_forward(params, query, key, value, mask, *, h):
    """query/key/value: (B, L, d_model) float32; mask: (B, Lq, Lk) int32 (1 = masked)."""
    B, Lq, D = query.shape
    Lk = key.shape[1]
    d_ff = params["ff_w1_t"].shape[1]
    d_head = D // h

    kern = functools.partial(_encoder_layer_kernel, h=h, d_head=d_head)

    bspec = lambda shape, imap: pl.BlockSpec(shape, imap)
    full = lambda *_: tuple(0 for _ in _)  # unused; explicit lambdas below for clarity

    in_specs = [
        pl.BlockSpec((1, Lq, D), lambda b: (b, 0, 0)),    # query
        pl.BlockSpec((1, Lk, D), lambda b: (b, 0, 0)),    # key
        pl.BlockSpec((1, Lk, D), lambda b: (b, 0, 0)),    # value
        pl.BlockSpec((1, Lq, Lk), lambda b: (b, 0, 0)),   # mask
        pl.BlockSpec((D, D), lambda b: (0, 0)),           # W_query^T
        pl.BlockSpec((D, D), lambda b: (0, 0)),           # W_concat^T
        pl.BlockSpec((1, D), lambda b: (0, 0)),           # ln1 gamma
        pl.BlockSpec((1, D), lambda b: (0, 0)),           # ln1 beta
        pl.BlockSpec((D, d_ff), lambda b: (0, 0)),        # fc1 W^T
        pl.BlockSpec((1, d_ff), lambda b: (0, 0)),        # fc1 b
        pl.BlockSpec((d_ff, D), lambda b: (0, 0)),        # fc2 W^T
        pl.BlockSpec((1, D), lambda b: (0, 0)),           # fc2 b
        pl.BlockSpec((1, D), lambda b: (0, 0)),           # ln2 gamma
        pl.BlockSpec((1, D), lambda b: (0, 0)),           # ln2 beta
    ]
    out_spec = pl.BlockSpec((1, Lq, D), lambda b: (b, 0, 0))

    return pl.pallas_call(
        kern,
        out_shape=jax.ShapeDtypeStruct((B, Lq, D), _F32),
        grid=(B,),
        in_specs=in_specs,
        out_specs=out_spec,
        compiler_params=pltpu.CompilerParams(
            dimension_semantics=("parallel",),
            vmem_limit_bytes=64 << 20),
    )(query, key, value, mask,
      params["wq_t"], params["wcat_t"],
      params["ln1_g"], params["ln1_b"],
      params["ff_w1_t"], params["ff_b1"],
      params["ff_w2_t"], params["ff_b2"],
      params["ln2_g"], params["ln2_b"])


# ------------------------------ parameter init ------------------------------ #

def init_params(key, h, d_model, d_ff):
    ks = jax.random.split(key, 8)

    def lin_t(k, fan_in, fan_out):           # nn.Linear weight, pre-transposed (in, out)
        lim = 1.0 / (fan_in ** 0.5)
        return jax.random.uniform(k, (fan_in, fan_out), _F32, -lim, lim)

    def lin_b(k, fan_in, n):
        lim = 1.0 / (fan_in ** 0.5)
        return jax.random.uniform(k, (1, n), _F32, -lim, lim)

    return {
        "wq_t": lin_t(ks[0], d_model, d_model),
        # fc_key / fc_value exist in the original module but their outputs are
        # discarded in forward() (it calls _prepare_proj on the raw key/value),
        # so they do not affect the forward pass and are not fed to the kernel.
        "wk_t_unused": lin_t(ks[1], d_model, d_model),
        "wv_t_unused": lin_t(ks[2], d_model, d_model),
        "wcat_t": lin_t(ks[3], d_model, d_model),
        "ln1_g": jnp.ones((1, d_model), _F32),
        "ln1_b": jnp.zeros((1, d_model), _F32),
        "ff_w1_t": lin_t(ks[4], d_model, d_ff),
        "ff_b1": lin_b(ks[5], d_model, d_ff),
        "ff_w2_t": lin_t(ks[6], d_ff, d_model),
        "ff_b2": lin_b(ks[7], d_ff, d_model),
        "ln2_g": jnp.ones((1, d_model), _F32),
        "ln2_b": jnp.zeros((1, d_model), _F32),
    }


# ----------------------------------- main ----------------------------------- #

if __name__ == "__main__":
    H, D_MODEL, D_FF = 4, 128, 256      # d_model = 128 -> lane-dense activations
    B, LQ, LK = 2, 8, 8

    root = jax.random.PRNGKey(0)
    k_par, k_q, k_k, k_v = jax.random.split(root, 4)
    params = init_params(k_par, H, D_MODEL, D_FF)

    query = jax.random.normal(k_q, (B, LQ, D_MODEL), _F32)
    key_in = jax.random.normal(k_k, (B, LK, D_MODEL), _F32)
    value = jax.random.normal(k_v, (B, LK, D_MODEL), _F32)
    # padding-style mask: mask the last two key positions of batch element 1
    mask = jnp.zeros((B, LQ, LK), jnp.int32).at[1, :, LK - 2:].set(1)

    fwd = jax.jit(functools.partial(encoder_layer_forward, h=H))
    out = fwd(params, query, key_in, value, mask)
    jax.block_until_ready(out)

    assert out.shape == (B, LQ, D_MODEL)
    assert bool(jnp.all(jnp.isfinite(out)))
    print("KERNEL_OK")
</pallas_src>

<mosaic_0001>
module attributes {stable_mosaic.version = 11 : i64} {
  func.func @_encoder_layer_kernel(%arg0: i32, %arg1: memref<1x8x128xf32, #tpu.memory_space<vmem>>, %arg2: memref<1x8x128xf32, #tpu.memory_space<vmem>>, %arg3: memref<1x8x128xf32, #tpu.memory_space<vmem>>, %arg4: memref<1x8x8xi32, #tpu.memory_space<vmem>>, %arg5: memref<128x128xf32, #tpu.memory_space<vmem>>, %arg6: memref<128x128xf32, #tpu.memory_space<vmem>>, %arg7: memref<1x128xf32, #tpu.memory_space<vmem>>, %arg8: memref<1x128xf32, #tpu.memory_space<vmem>>, %arg9: memref<128x256xf32, #tpu.memory_space<vmem>>, %arg10: memref<1x256xf32, #tpu.memory_space<vmem>>, %arg11: memref<256x128xf32, #tpu.memory_space<vmem>>, %arg12: memref<1x128xf32, #tpu.memory_space<vmem>>, %arg13: memref<1x128xf32, #tpu.memory_space<vmem>>, %arg14: memref<1x128xf32, #tpu.memory_space<vmem>>, %arg15: memref<1x8x128xf32, #tpu.memory_space<vmem>>) attributes {dimension_semantics = [#tpu.dimension_semantics<parallel>], iteration_bounds = array<i64: 2>, scalar_prefetch = 0 : i64, scratch_operands = 0 : i64, tpu.core_type = #tpu.core_type<tc>, window_params = [{transform_indices = @transform_0, window_bounds = array<i64: 1, 8, 128>}, {transform_indices = @transform_1, window_bounds = array<i64: 1, 8, 128>}, {transform_indices = @transform_2, window_bounds = array<i64: 1, 8, 128>}, {transform_indices = @transform_3, window_bounds = array<i64: 1, 8, 8>}, {pipeline_mode = #tpu.pipeline_mode<synchronous>, transform_indices = @transform_4, window_bounds = array<i64: 128, 128>}, {pipeline_mode = #tpu.pipeline_mode<synchronous>, transform_indices = @transform_5, window_bounds = array<i64: 128, 128>}, {pipeline_mode = #tpu.pipeline_mode<synchronous>, transform_indices = @transform_6, window_bounds = array<i64: 1, 128>}, {pipeline_mode = #tpu.pipeline_mode<synchronous>, transform_indices = @transform_7, window_bounds = array<i64: 1, 128>}, {pipeline_mode = #tpu.pipeline_mode<synchronous>, transform_indices = @transform_8, window_bounds = array<i64: 128, 256>}, {pipeline_mode = #tpu.pipeline_mode<synchronous>, transform_indices = @transform_9, window_bounds = array<i64: 1, 256>}, {pipeline_mode = #tpu.pipeline_mode<synchronous>, transform_indices = @transform_10, window_bounds = array<i64: 256, 128>}, {pipeline_mode = #tpu.pipeline_mode<synchronous>, transform_indices = @transform_11, window_bounds = array<i64: 1, 128>}, {pipeline_mode = #tpu.pipeline_mode<synchronous>, transform_indices = @transform_12, window_bounds = array<i64: 1, 128>}, {pipeline_mode = #tpu.pipeline_mode<synchronous>, transform_indices = @transform_13, window_bounds = array<i64: 1, 128>}, {transform_indices = @transform_14, window_bounds = array<i64: 1, 8, 128>}]} {
    %c0 = arith.constant 0 : index
    %c0_0 = arith.constant 0 : index
    %c0_1 = arith.constant 0 : index
    %0 = vector.load %arg1[%c0, %c0_0, %c0_1] : memref<1x8x128xf32, #tpu.memory_space<vmem>>, vector<1x8x128xf32>
    %1 = vector.shape_cast %0 : vector<1x8x128xf32> to vector<8x128xf32>
    %c0_2 = arith.constant 0 : index
    %c0_3 = arith.constant 0 : index
    %c0_4 = arith.constant 0 : index
    %2 = vector.load %arg2[%c0_2, %c0_3, %c0_4] : memref<1x8x128xf32, #tpu.memory_space<vmem>>, vector<1x8x128xf32>
    %3 = vector.shape_cast %2 : vector<1x8x128xf32> to vector<8x128xf32>
    %c0_5 = arith.constant 0 : index
    %c0_6 = arith.constant 0 : index
    %c0_7 = arith.constant 0 : index
    %4 = vector.load %arg3[%c0_5, %c0_6, %c0_7] : memref<1x8x128xf32, #tpu.memory_space<vmem>>, vector<1x8x128xf32>
    %5 = vector.shape_cast %4 : vector<1x8x128xf32> to vector<8x128xf32>
    %c0_8 = arith.constant 0 : index
    %c0_9 = arith.constant 0 : index
    %c0_10 = arith.constant 0 : index
    %6 = vector.load %arg4[%c0_8, %c0_9, %c0_10] : memref<1x8x8xi32, #tpu.memory_space<vmem>>, vector<1x8x8xi32>
    %7 = vector.shape_cast %6 : vector<1x8x8xi32> to vector<8x8xi32>
    %c0_11 = arith.constant 0 : index
    %c0_12 = arith.constant 0 : index
    %8 = vector.load %arg5[%c0_11, %c0_12] : memref<128x128xf32, #tpu.memory_space<vmem>>, vector<128x128xf32>
    %cst = arith.constant dense<0.000000e+00> : vector<8x128xf32>
    %9 = tpu.matmul %1, %8, %cst {dimension_numbers = #tpu.dot_dimension_numbers<[1], [0], [0], [1], [0, 0, 1, 1], [], []>} : vector<8x128xf32>, vector<128x128xf32>, vector<8x128xf32> -> vector<8x128xf32>
    %cst_13 = arith.constant 0.000000e+00 : f32
    %10 = vector.broadcast %cst_13 : f32 to vector<8x128xf32>
    %11 = vector.extract_strided_slice %9 {offsets = [0, 0], sizes = [8, 32], strides = [1, 1]} : vector<8x128xf32> to vector<8x32xf32>
    %12 = vector.extract_strided_slice %3 {offsets = [0, 0], sizes = [8, 32], strides = [1, 1]} : vector<8x128xf32> to vector<8x32xf32>
    %13 = vector.extract_strided_slice %5 {offsets = [0, 0], sizes = [8, 32], strides = [1, 1]} : vector<8x128xf32> to vector<8x32xf32>
    %cst_14 = arith.constant dense<0.000000e+00> : vector<8x8xf32>
    %14 = tpu.matmul %11, %12, %cst_14 {dimension_numbers = #tpu.dot_dimension_numbers<[1], [1], [0], [0], [0, 0, 1, 0], [], []>} : vector<8x32xf32>, vector<8x32xf32>, vector<8x8xf32> -> vector<8x8xf32>
    %cst_15 = arith.constant 0.176776692 : f32
    %15 = vector.broadcast %cst_15 : f32 to vector<8x8xf32>
    %16 = arith.mulf %14, %15 : vector<8x8xf32>
    %c0_i32 = arith.constant 0 : i32
    %17 = vector.broadcast %c0_i32 : i32 to vector<8x8xi32>
    %18 = arith.cmpi ne, %7, %17 : vector<8x8xi32>
    %cst_16 = arith.constant 0xFF800000 : f32
    %19 = vector.broadcast %cst_16 : f32 to vector<8x8xf32>
    %20 = arith.select %18, %19, %16 : vector<8x8xi1>, vector<8x8xf32>
    %cst_17 = arith.constant dense<0xFF800000> : vector<8xf32>
    %21 = vector.multi_reduction <maximumf>, %20, %cst_17 [1] : vector<8x8xf32> to vector<8xf32>
    %22 = vector.shape_cast %21 : vector<8xf32> to vector<8x1xf32>
    %23 = vector.broadcast %22 : vector<8x1xf32> to vector<8x8xf32>
    %24 = arith.subf %20, %23 : vector<8x8xf32>
    %25 = math.exp %24 : vector<8x8xf32>
    %cst_18 = arith.constant dense<0.000000e+00> : vector<8xf32>
    %26 = vector.multi_reduction <add>, %25, %cst_18 [1] : vector<8x8xf32> to vector<8xf32>
    %27 = vector.shape_cast %26 : vector<8xf32> to vector<8x1xf32>
    %28 = tpu.reciprocal %27 {approx = true} : vector<8x1xf32> -> vector<8x1xf32>
    %29 = vector.broadcast %28 : vector<8x1xf32> to vector<8x8xf32>
    %30 = arith.mulf %25, %29 : vector<8x8xf32>
    %cst_19 = arith.constant dense<0.000000e+00> : vector<8x32xf32>
    %31 = tpu.matmul %30, %13, %cst_19 {dimension_numbers = #tpu.dot_dimension_numbers<[1], [0], [0], [1], [0, 0, 1, 1], [], []>} : vector<8x8xf32>, vector<8x32xf32>, vector<8x32xf32> -> vector<8x32xf32>
    %c0_20 = arith.constant 0 : index
    %c0_21 = arith.constant 0 : index
    %32 = vector.load %arg6[%c0_20, %c0_21] : memref<128x128xf32, #tpu.memory_space<vmem>>, vector<32x128xf32>
    %cst_22 = arith.constant dense<0.000000e+00> : vector<8x128xf32>
    %33 = tpu.matmul %31, %32, %cst_22 {dimension_numbers = #tpu.dot_dimension_numbers<[1], [0], [0], [1], [0, 0, 1, 1], [], []>} : vector<8x32xf32>, vector<32x128xf32>, vector<8x128xf32> -> vector<8x128xf32>
    %34 = arith.addf %10, %33 : vector<8x128xf32>
    %35 = vector.extract_strided_slice %9 {offsets = [0, 32], sizes = [8, 32], strides = [1, 1]} : vector<8x128xf32> to vector<8x32xf32>
    %36 = vector.extract_strided_slice %3 {offsets = [0, 32], sizes = [8, 32], strides = [1, 1]} : vector<8x128xf32> to vector<8x32xf32>
    %37 = vector.extract_strided_slice %5 {offsets = [0, 32], sizes = [8, 32], strides = [1, 1]} : vector<8x128xf32> to vector<8x32xf32>
    %cst_23 = arith.constant dense<0.000000e+00> : vector<8x8xf32>
    %38 = tpu.matmul %35, %36, %cst_23 {dimension_numbers = #tpu.dot_dimension_numbers<[1], [1], [0], [0], [0, 0, 1, 0], [], []>} : vector<8x32xf32>, vector<8x32xf32>, vector<8x8xf32> -> vector<8x8xf32>
    %cst_24 = arith.constant 0.176776692 : f32
    %39 = vector.broadcast %cst_24 : f32 to vector<8x8xf32>
    %40 = arith.mulf %38, %39 : vector<8x8xf32>
    %c0_i32_25 = arith.constant 0 : i32
    %41 = vector.broadcast %c0_i32_25 : i32 to vector<8x8xi32>
    %42 = arith.cmpi ne, %7, %41 : vector<8x8xi32>
    %cst_26 = arith.constant 0xFF800000 : f32
    %43 = vector.broadcast %cst_26 : f32 to vector<8x8xf32>
    %44 = arith.select %42, %43, %40 : vector<8x8xi1>, vector<8x8xf32>
    %cst_27 = arith.constant dense<0xFF800000> : vector<8xf32>
    %45 = vector.multi_reduction <maximumf>, %44, %cst_27 [1] : vector<8x8xf32> to vector<8xf32>
    %46 = vector.shape_cast %45 : vector<8xf32> to vector<8x1xf32>
    %47 = vector.broadcast %46 : vector<8x1xf32> to vector<8x8xf32>
    %48 = arith.subf %44, %47 : vector<8x8xf32>
    %49 = math.exp %48 : vector<8x8xf32>
    %cst_28 = arith.constant dense<0.000000e+00> : vector<8xf32>
    %50 = vector.multi_reduction <add>, %49, %cst_28 [1] : vector<8x8xf32> to vector<8xf32>
    %51 = vector.shape_cast %50 : vector<8xf32> to vector<8x1xf32>
    %52 = tpu.reciprocal %51 {approx = true} : vector<8x1xf32> -> vector<8x1xf32>
    %53 = vector.broadcast %52 : vector<8x1xf32> to vector<8x8xf32>
    %54 = arith.mulf %49, %53 : vector<8x8xf32>
    %cst_29 = arith.constant dense<0.000000e+00> : vector<8x32xf32>
    %55 = tpu.matmul %54, %37, %cst_29 {dimension_numbers = #tpu.dot_dimension_numbers<[1], [0], [0], [1], [0, 0, 1, 1], [], []>} : vector<8x8xf32>, vector<8x32xf32>, vector<8x32xf32> -> vector<8x32xf32>
    %c32 = arith.constant 32 : index
    %c0_30 = arith.constant 0 : index
    %56 = vector.load %arg6[%c32, %c0_30] : memref<128x128xf32, #tpu.memory_space<vmem>>, vector<32x128xf32>
    %cst_31 = arith.constant dense<0.000000e+00> : vector<8x128xf32>
    %57 = tpu.matmul %55, %56, %cst_31 {dimension_numbers = #tpu.dot_dimension_numbers<[1], [0], [0], [1], [0, 0, 1, 1], [], []>} : vector<8x32xf32>, vector<32x128xf32>, vector<8x128xf32> -> vector<8x128xf32>
    %58 = arith.addf %34, %57 : vector<8x128xf32>
    %59 = vector.extract_strided_slice %9 {offsets = [0, 64], sizes = [8, 32], strides = [1, 1]} : vector<8x128xf32> to vector<8x32xf32>
    %60 = vector.extract_strided_slice %3 {offsets = [0, 64], sizes = [8, 32], strides = [1, 1]} : vector<8x128xf32> to vector<8x32xf32>
    %61 = vector.extract_strided_slice %5 {offsets = [0, 64], sizes = [8, 32], strides = [1, 1]} : vector<8x128xf32> to vector<8x32xf32>
    %cst_32 = arith.constant dense<0.000000e+00> : vector<8x8xf32>
    %62 = tpu.matmul %59, %60, %cst_32 {dimension_numbers = #tpu.dot_dimension_numbers<[1], [1], [0], [0], [0, 0, 1, 0], [], []>} : vector<8x32xf32>, vector<8x32xf32>, vector<8x8xf32> -> vector<8x8xf32>
    %cst_33 = arith.constant 0.176776692 : f32
    %63 = vector.broadcast %cst_33 : f32 to vector<8x8xf32>
    %64 = arith.mulf %62, %63 : vector<8x8xf32>
    %c0_i32_34 = arith.constant 0 : i32
    %65 = vector.broadcast %c0_i32_34 : i32 to vector<8x8xi32>
    %66 = arith.cmpi ne, %7, %65 : vector<8x8xi32>
    %cst_35 = arith.constant 0xFF800000 : f32
    %67 = vector.broadcast %cst_35 : f32 to vector<8x8xf32>
    %68 = arith.select %66, %67, %64 : vector<8x8xi1>, vector<8x8xf32>
    %cst_36 = arith.constant dense<0xFF800000> : vector<8xf32>
    %69 = vector.multi_reduction <maximumf>, %68, %cst_36 [1] : vector<8x8xf32> to vector<8xf32>
    %70 = vector.shape_cast %69 : vector<8xf32> to vector<8x1xf32>
    %71 = vector.broadcast %70 : vector<8x1xf32> to vector<8x8xf32>
    %72 = arith.subf %68, %71 : vector<8x8xf32>
    %73 = math.exp %72 : vector<8x8xf32>
    %cst_37 = arith.constant dense<0.000000e+00> : vector<8xf32>
    %74 = vector.multi_reduction <add>, %73, %cst_37 [1] : vector<8x8xf32> to vector<8xf32>
    %75 = vector.shape_cast %74 : vector<8xf32> to vector<8x1xf32>
    %76 = tpu.reciprocal %75 {approx = true} : vector<8x1xf32> -> vector<8x1xf32>
    %77 = vector.broadcast %76 : vector<8x1xf32> to vector<8x8xf32>
    %78 = arith.mulf %73, %77 : vector<8x8xf32>
    %cst_38 = arith.constant dense<0.000000e+00> : vector<8x32xf32>
    %79 = tpu.matmul %78, %61, %cst_38 {dimension_numbers = #tpu.dot_dimension_numbers<[1], [0], [0], [1], [0, 0, 1, 1], [], []>} : vector<8x8xf32>, vector<8x32xf32>, vector<8x32xf32> -> vector<8x32xf32>
    %c64 = arith.constant 64 : index
    %c0_39 = arith.constant 0 : index
    %80 = vector.load %arg6[%c64, %c0_39] : memref<128x128xf32, #tpu.memory_space<vmem>>, vector<32x128xf32>
    %cst_40 = arith.constant dense<0.000000e+00> : vector<8x128xf32>
    %81 = tpu.matmul %79, %80, %cst_40 {dimension_numbers = #tpu.dot_dimension_numbers<[1], [0], [0], [1], [0, 0, 1, 1], [], []>} : vector<8x32xf32>, vector<32x128xf32>, vector<8x128xf32> -> vector<8x128xf32>
    %82 = arith.addf %58, %81 : vector<8x128xf32>
    %83 = vector.extract_strided_slice %9 {offsets = [0, 96], sizes = [8, 32], strides = [1, 1]} : vector<8x128xf32> to vector<8x32xf32>
    %84 = vector.extract_strided_slice %3 {offsets = [0, 96], sizes = [8, 32], strides = [1, 1]} : vector<8x128xf32> to vector<8x32xf32>
    %85 = vector.extract_strided_slice %5 {offsets = [0, 96], sizes = [8, 32], strides = [1, 1]} : vector<8x128xf32> to vector<8x32xf32>
    %cst_41 = arith.constant dense<0.000000e+00> : vector<8x8xf32>
    %86 = tpu.matmul %83, %84, %cst_41 {dimension_numbers = #tpu.dot_dimension_numbers<[1], [1], [0], [0], [0, 0, 1, 0], [], []>} : vector<8x32xf32>, vector<8x32xf32>, vector<8x8xf32> -> vector<8x8xf32>
    %cst_42 = arith.constant 0.176776692 : f32
    %87 = vector.broadcast %cst_42 : f32 to vector<8x8xf32>
    %88 = arith.mulf %86, %87 : vector<8x8xf32>
    %c0_i32_43 = arith.constant 0 : i32
    %89 = vector.broadcast %c0_i32_43 : i32 to vector<8x8xi32>
    %90 = arith.cmpi ne, %7, %89 : vector<8x8xi32>
    %cst_44 = arith.constant 0xFF800000 : f32
    %91 = vector.broadcast %cst_44 : f32 to vector<8x8xf32>
    %92 = arith.select %90, %91, %88 : vector<8x8xi1>, vector<8x8xf32>
    %cst_45 = arith.constant dense<0xFF800000> : vector<8xf32>
    %93 = vector.multi_reduction <maximumf>, %92, %cst_45 [1] : vector<8x8xf32> to vector<8xf32>
    %94 = vector.shape_cast %93 : vector<8xf32> to vector<8x1xf32>
    %95 = vector.broadcast %94 : vector<8x1xf32> to vector<8x8xf32>
    %96 = arith.subf %92, %95 : vector<8x8xf32>
    %97 = math.exp %96 : vector<8x8xf32>
    %cst_46 = arith.constant dense<0.000000e+00> : vector<8xf32>
    %98 = vector.multi_reduction <add>, %97, %cst_46 [1] : vector<8x8xf32> to vector<8xf32>
    %99 = vector.shape_cast %98 : vector<8xf32> to vector<8x1xf32>
    %100 = tpu.reciprocal %99 {approx = true} : vector<8x1xf32> -> vector<8x1xf32>
    %101 = vector.broadcast %100 : vector<8x1xf32> to vector<8x8xf32>
    %102 = arith.mulf %97, %101 : vector<8x8xf32>
    %cst_47 = arith.constant dense<0.000000e+00> : vector<8x32xf32>
    %103 = tpu.matmul %102, %85, %cst_47 {dimension_numbers = #tpu.dot_dimension_numbers<[1], [0], [0], [1], [0, 0, 1, 1], [], []>} : vector<8x8xf32>, vector<8x32xf32>, vector<8x32xf32> -> vector<8x32xf32>
    %c96 = arith.constant 96 : index
    %c0_48 = arith.constant 0 : index
    %104 = vector.load %arg6[%c96, %c0_48] : memref<128x128xf32, #tpu.memory_space<vmem>>, vector<32x128xf32>
    %cst_49 = arith.constant dense<0.000000e+00> : vector<8x128xf32>
    %105 = tpu.matmul %103, %104, %cst_49 {dimension_numbers = #tpu.dot_dimension_numbers<[1], [0], [0], [1], [0, 0, 1, 1], [], []>} : vector<8x32xf32>, vector<32x128xf32>, vector<8x128xf32> -> vector<8x128xf32>
    %106 = arith.addf %82, %105 : vector<8x128xf32>
    %107 = arith.addf %1, %106 : vector<8x128xf32>
    %c0_50 = arith.constant 0 : index
    %c0_51 = arith.constant 0 : index
    %108 = vector.load %arg7[%c0_50, %c0_51] : memref<1x128xf32, #tpu.memory_space<vmem>>, vector<1x128xf32>
    %c0_52 = arith.constant 0 : index
    %c0_53 = arith.constant 0 : index
    %109 = vector.load %arg8[%c0_52, %c0_53] : memref<1x128xf32, #tpu.memory_space<vmem>>, vector<1x128xf32>
    %cst_54 = arith.constant dense<0.000000e+00> : vector<8xf32>
    %110 = vector.multi_reduction <add>, %107, %cst_54 [1] : vector<8x128xf32> to vector<8xf32>
    %111 = vector.shape_cast %110 : vector<8xf32> to vector<8x1xf32>
    %cst_55 = arith.constant 1.280000e+02 : f32
    %112 = vector.broadcast %cst_55 : f32 to vector<8x1xf32>
    %113 = arith.divf %111, %112 : vector<8x1xf32>
    %114 = vector.broadcast %113 : vector<8x1xf32> to vector<8x128xf32>
    %115 = arith.subf %107, %114 : vector<8x128xf32>
    %116 = arith.mulf %115, %115 : vector<8x128xf32>
    %cst_56 = arith.constant dense<0.000000e+00> : vector<8xf32>
    %117 = vector.multi_reduction <add>, %116, %cst_56 [1] : vector<8x128xf32> to vector<8xf32>
    %118 = vector.shape_cast %117 : vector<8xf32> to vector<8x1xf32>
    %cst_57 = arith.constant 1.270000e+02 : f32
    %119 = vector.broadcast %cst_57 : f32 to vector<8x1xf32>
    %120 = arith.divf %118, %119 : vector<8x1xf32>
    %121 = math.sqrt %120 : vector<8x1xf32>
    %122 = vector.broadcast %108 : vector<1x128xf32> to vector<8x128xf32>
    %123 = arith.mulf %122, %115 : vector<8x128xf32>
    %cst_58 = arith.constant 9.99999997E-7 : f32
    %124 = vector.broadcast %cst_58 : f32 to vector<8x1xf32>
    %125 = arith.addf %121, %124 : vector<8x1xf32>
    %126 = vector.broadcast %125 : vector<8x1xf32> to vector<8x128xf32>
    %127 = arith.divf %123, %126 : vector<8x128xf32>
    %128 = vector.broadcast %109 : vector<1x128xf32> to vector<8x128xf32>
    %129 = arith.addf %127, %128 : vector<8x128xf32>
    %c0_59 = arith.constant 0 : index
    %c0_60 = arith.constant 0 : index
    %130 = vector.load %arg9[%c0_59, %c0_60] : memref<128x256xf32, #tpu.memory_space<vmem>>, vector<128x256xf32>
    %cst_61 = arith.constant dense<0.000000e+00> : vector<8x256xf32>
    %131 = tpu.matmul %129, %130, %cst_61 {dimension_numbers = #tpu.dot_dimension_numbers<[1], [0], [0], [1], [0, 0, 1, 1], [], []>} : vector<8x128xf32>, vector<128x256xf32>, vector<8x256xf32> -> vector<8x256xf32>
    %c0_62 = arith.constant 0 : index
    %c0_63 = arith.constant 0 : index
    %132 = vector.load %arg10[%c0_62, %c0_63] : memref<1x256xf32, #tpu.memory_space<vmem>>, vector<1x256xf32>
    %133 = vector.broadcast %132 : vector<1x256xf32> to vector<8x256xf32>
    %134 = arith.addf %131, %133 : vector<8x256xf32>
    %cst_64 = arith.constant 0.000000e+00 : f32
    %135 = vector.broadcast %cst_64 : f32 to vector<8x256xf32>
    %136 = arith.maximumf %134, %135 : vector<8x256xf32>
    %c0_65 = arith.constant 0 : index
    %c0_66 = arith.constant 0 : index
    %137 = vector.load %arg11[%c0_65, %c0_66] : memref<256x128xf32, #tpu.memory_space<vmem>>, vector<256x128xf32>
    %cst_67 = arith.constant dense<0.000000e+00> : vector<8x128xf32>
    %138 = tpu.matmul %136, %137, %cst_67 {dimension_numbers = #tpu.dot_dimension_numbers<[1], [0], [0], [1], [0, 0, 1, 1], [], []>} : vector<8x256xf32>, vector<256x128xf32>, vector<8x128xf32> -> vector<8x128xf32>
    %c0_68 = arith.constant 0 : index
    %c0_69 = arith.constant 0 : index
    %139 = vector.load %arg12[%c0_68, %c0_69] : memref<1x128xf32, #tpu.memory_space<vmem>>, vector<1x128xf32>
    %140 = vector.broadcast %139 : vector<1x128xf32> to vector<8x128xf32>
    %141 = arith.addf %138, %140 : vector<8x128xf32>
    %142 = arith.addf %129, %141 : vector<8x128xf32>
    %c0_70 = arith.constant 0 : index
    %c0_71 = arith.constant 0 : index
    %143 = vector.load %arg13[%c0_70, %c0_71] : memref<1x128xf32, #tpu.memory_space<vmem>>, vector<1x128xf32>
    %c0_72 = arith.constant 0 : index
    %c0_73 = arith.constant 0 : index
    %144 = vector.load %arg14[%c0_72, %c0_73] : memref<1x128xf32, #tpu.memory_space<vmem>>, vector<1x128xf32>
    %cst_74 = arith.constant dense<0.000000e+00> : vector<8xf32>
    %145 = vector.multi_reduction <add>, %142, %cst_74 [1] : vector<8x128xf32> to vector<8xf32>
    %146 = vector.shape_cast %145 : vector<8xf32> to vector<8x1xf32>
    %cst_75 = arith.constant 1.280000e+02 : f32
    %147 = vector.broadcast %cst_75 : f32 to vector<8x1xf32>
    %148 = arith.divf %146, %147 : vector<8x1xf32>
    %149 = vector.broadcast %148 : vector<8x1xf32> to vector<8x128xf32>
    %150 = arith.subf %142, %149 : vector<8x128xf32>
    %151 = arith.mulf %150, %150 : vector<8x128xf32>
    %cst_76 = arith.constant dense<0.000000e+00> : vector<8xf32>
    %152 = vector.multi_reduction <add>, %151, %cst_76 [1] : vector<8x128xf32> to vector<8xf32>
    %153 = vector.shape_cast %152 : vector<8xf32> to vector<8x1xf32>
    %cst_77 = arith.constant 1.270000e+02 : f32
    %154 = vector.broadcast %cst_77 : f32 to vector<8x1xf32>
    %155 = arith.divf %153, %154 : vector<8x1xf32>
    %156 = math.sqrt %155 : vector<8x1xf32>
    %157 = vector.broadcast %143 : vector<1x128xf32> to vector<8x128xf32>
    %158 = arith.mulf %157, %150 : vector<8x128xf32>
    %cst_78 = arith.constant 9.99999997E-7 : f32
    %159 = vector.broadcast %cst_78 : f32 to vector<8x1xf32>
    %160 = arith.addf %156, %159 : vector<8x1xf32>
    %161 = vector.broadcast %160 : vector<8x1xf32> to vector<8x128xf32>
    %162 = arith.divf %158, %161 : vector<8x128xf32>
    %163 = vector.broadcast %144 : vector<1x128xf32> to vector<8x128xf32>
    %164 = arith.addf %162, %163 : vector<8x128xf32>
    %c0_79 = arith.constant 0 : index
    %c0_80 = arith.constant 0 : index
    %c0_81 = arith.constant 0 : index
    %165 = vector.load %arg15[%c0_79, %c0_80, %c0_81] : memref<1x8x128xf32, #tpu.memory_space<vmem>>, vector<1x8x128xf32>
    %166 = vector.shape_cast %165 : vector<1x8x128xf32> to vector<8x128xf32>
    %167 = vector.shape_cast %164 : vector<8x128xf32> to vector<1x8x128xf32>
    tpu.vector_store %arg15[%c0_79, %c0_80, %c0_81], %167 {strides = array<i32>} : memref<1x8x128xf32, #tpu.memory_space<vmem>>, vector<1x8x128xf32>,
    return
  }
  func.func @transform_0(%arg0: i32) -> (i32, i32, i32) {
    %c0_i32 = arith.constant 0 : i32
    %c0_i32_0 = arith.constant 0 : i32
    %c0_i32_1 = arith.constant 0 : i32
    return %arg0, %c0_i32, %c0_i32_0 : i32, i32, i32
  }
  func.func @transform_1(%arg0: i32) -> (i32, i32, i32) {
    %c0_i32 = arith.constant 0 : i32
    %c0_i32_0 = arith.constant 0 : i32
    %c0_i32_1 = arith.constant 0 : i32
    return %arg0, %c0_i32, %c0_i32_0 : i32, i32, i32
  }
  func.func @transform_2(%arg0: i32) -> (i32, i32, i32) {
    %c0_i32 = arith.constant 0 : i32
    %c0_i32_0 = arith.constant 0 : i32
    %c0_i32_1 = arith.constant 0 : i32
    return %arg0, %c0_i32, %c0_i32_0 : i32, i32, i32
  }
  func.func @transform_3(%arg0: i32) -> (i32, i32, i32) {
    %c0_i32 = arith.constant 0 : i32
    %c0_i32_0 = arith.constant 0 : i32
    %c0_i32_1 = arith.constant 0 : i32
    return %arg0, %c0_i32, %c0_i32_0 : i32, i32, i32
  }
  func.func @transform_4(%arg0: i32) -> (i32, i32) {
    %c0_i32 = arith.constant 0 : i32
    %c0_i32_0 = arith.constant 0 : i32
    %c0_i32_1 = arith.constant 0 : i32
    return %c0_i32, %c0_i32_0 : i32, i32
  }
  func.func @transform_5(%arg0: i32) -> (i32, i32) {
    %c0_i32 = arith.constant 0 : i32
    %c0_i32_0 = arith.constant 0 : i32
    %c0_i32_1 = arith.constant 0 : i32
    return %c0_i32, %c0_i32_0 : i32, i32
  }
  func.func @transform_6(%arg0: i32) -> (i32, i32) {
    %c0_i32 = arith.constant 0 : i32
    %c0_i32_0 = arith.constant 0 : i32
    %c0_i32_1 = arith.constant 0 : i32
    return %c0_i32, %c0_i32_0 : i32, i32
  }
  func.func @transform_7(%arg0: i32) -> (i32, i32) {
    %c0_i32 = arith.constant 0 : i32
    %c0_i32_0 = arith.constant 0 : i32
    %c0_i32_1 = arith.constant 0 : i32
    return %c0_i32, %c0_i32_0 : i32, i32
  }
  func.func @transform_8(%arg0: i32) -> (i32, i32) {
    %c0_i32 = arith.constant 0 : i32
    %c0_i32_0 = arith.constant 0 : i32
    %c0_i32_1 = arith.constant 0 : i32
    return %c0_i32, %c0_i32_0 : i32, i32
  }
  func.func @transform_9(%arg0: i32) -> (i32, i32) {
    %c0_i32 = arith.constant 0 : i32
    %c0_i32_0 = arith.constant 0 : i32
    %c0_i32_1 = arith.constant 0 : i32
    return %c0_i32, %c0_i32_0 : i32, i32
  }
  func.func @transform_10(%arg0: i32) -> (i32, i32) {
    %c0_i32 = arith.constant 0 : i32
    %c0_i32_0 = arith.constant 0 : i32
    %c0_i32_1 = arith.constant 0 : i32
    return %c0_i32, %c0_i32_0 : i32, i32
  }
  func.func @transform_11(%arg0: i32) -> (i32, i32) {
    %c0_i32 = arith.constant 0 : i32
    %c0_i32_0 = arith.constant 0 : i32
    %c0_i32_1 = arith.constant 0 : i32
    return %c0_i32, %c0_i32_0 : i32, i32
  }
  func.func @transform_12(%arg0: i32) -> (i32, i32) {
    %c0_i32 = arith.constant 0 : i32
    %c0_i32_0 = arith.constant 0 : i32
    %c0_i32_1 = arith.constant 0 : i32
    return %c0_i32, %c0_i32_0 : i32, i32
  }
  func.func @transform_13(%arg0: i32) -> (i32, i32) {
    %c0_i32 = arith.constant 0 : i32
    %c0_i32_0 = arith.constant 0 : i32
    %c0_i32_1 = arith.constant 0 : i32
    return %c0_i32, %c0_i32_0 : i32, i32
  }
  func.func @transform_14(%arg0: i32) -> (i32, i32, i32) {
    %c0_i32 = arith.constant 0 : i32
    %c0_i32_0 = arith.constant 0 : i32
    %c0_i32_1 = arith.constant 0 : i32
    return %arg0, %c0_i32, %c0_i32_0 : i32, i32, i32
  }
}

</mosaic_0001>

<llo_original>
// kernel: encoder_layer_forward.1
$region0: #{encoder_layer_forward.1}
  #allocation0 [shape = 'u32[]', space=smem, size = 0x4, offset = 0x4, fixed_abs, tag = 'smem constant byte address 0x4 - core index']
  #allocation1 [shape = 'u32[144,128]{1,0:T(1,128)}', space=vmem, size = 0x12000, scoped, tag = 'internal scratch']
  %s0 = inlined_call_operand.vmem [shape: f32[2,8,128], index: 0, kind: input, shape index: {}]
  %s1 = inlined_call_operand.hbm [shape: f32[2,8,128], index: 1, kind: input, shape index: {}]
  %s2 = inlined_call_operand.hbm [shape: f32[2,8,128], index: 2, kind: input, shape index: {}]
  %s3 = inlined_call_operand.hbm [shape: s32[2,8,8], index: 3, kind: input, shape index: {}]
  %s4 = inlined_call_operand.hbm [shape: f32[128,128], index: 4, kind: input, shape index: {}]
  %s5 = inlined_call_operand.hbm [shape: f32[128,128], index: 5, kind: input, shape index: {}]
  %s6 = inlined_call_operand.vmem [shape: f32[1,128], index: 6, kind: input, shape index: {}]
  %s7 = inlined_call_operand.vmem [shape: f32[1,128], index: 7, kind: input, shape index: {}]
  %s8 = inlined_call_operand.hbm [shape: f32[128,256], index: 8, kind: input, shape index: {}]
  %s9 = inlined_call_operand.hbm [shape: f32[1,256], index: 9, kind: input, shape index: {}]
  %s10 = inlined_call_operand.hbm [shape: f32[256,128], index: 10, kind: input, shape index: {}]
  %s11 = inlined_call_operand.hbm [shape: f32[1,128], index: 11, kind: input, shape index: {}]
  %s12 = inlined_call_operand.hbm [shape: f32[1,128], index: 12, kind: input, shape index: {}]
  %s13 = inlined_call_operand.hbm [shape: f32[1,128], index: 13, kind: input, shape index: {}]
  %s14 = inlined_call_operand.hbm [shape: f32[2,8,128], index: 14, kind: output, shape index: {}]
  %s15 = sld [smem:[#allocation0]]
  $region133: #{encoder_layer_forward.1} parent=0
    _
  %s17 = ssub.s32 1, %s15
  %s18 = scalar_select 0, %s17, %s15
  $region1: #{encoder_layer_forward.1} parent=0
    #allocation2 [shape = 'u8[8192]{0}', space=vmem, size = 0x2000, scoped, tag = 'input window, operand 1']
    #allocation3 [shape = 's32[2]{0}', space=sflag, size = 0x8, scoped, tag = 'scoped memory for encoder_layer_forward.1']
    #allocation4 [shape = 's32[2]{0}', space=sflag, size = 0x8, scoped, tag = 'scoped memory for encoder_layer_forward.1']
    #allocation5 [shape = 'u8[8192]{0}', space=vmem, size = 0x2000, scoped, tag = 'input window, operand 2']
    #allocation6 [shape = 's32[2]{0}', space=sflag, size = 0x8, scoped, tag = 'scoped memory for encoder_layer_forward.1']
    #allocation7 [shape = 'u8[8192]{0}', space=vmem, size = 0x2000, scoped, tag = 'input window, operand 3']
    #allocation8 [shape = 'u8[65536]{0}', space=vmem, size = 0x10000, scoped, tag = 'input window, operand 4, single buffered']
    #allocation9 [shape = 's32[1]{0}', space=sflag, size = 0x4, scoped, tag = 'scoped memory for encoder_layer_forward.1']
    #allocation10 [shape = 'u8[65536]{0}', space=vmem, size = 0x10000, scoped, tag = 'input window, operand 5, single buffered']
    #allocation11 [shape = 'u8[131072]{0}', space=vmem, size = 0x20000, scoped, tag = 'input window, operand 8, single buffered']
    #allocation12 [shape = 's32[1]{0}', space=sflag, size = 0x4, scoped, tag = 'scoped memory for encoder_layer_forward.1']
    #allocation13 [shape = 'u8[1024]{0}', space=vmem, size = 0x400, scoped, tag = 'input window, operand 9, single buffered']
    #allocation14 [shape = 'u8[131072]{0}', space=vmem, size = 0x20000, scoped, tag = 'input window, operand 10, single buffered']
    #allocation15 [shape = 's32[1]{0}', space=sflag, size = 0x4, scoped, tag = 'scoped memory for encoder_layer_forward.1']
    #allocation16 [shape = 'u8[512]{0}', space=vmem, size = 0x400, scoped, tag = 'input window, operand 11, single buffered']
    #allocation17 [shape = 'u8[512]{0}', space=vmem, size = 0x400, scoped, tag = 'input window, operand 12, single buffered']
    #allocation18 [shape = 's32[1]{0}', space=sflag, size = 0x4, scoped, tag = 'scoped memory for encoder_layer_forward.1']
    #allocation19 [shape = 'u8[512]{0}', space=vmem, size = 0x400, scoped, tag = 'input window, operand 13, single buffered']
    #allocation20 [shape = 'u8[8192]{0}', space=vmem, size = 0x2000, scoped, tag = 'output window, operand 0']
    %19 = vsyncpa [#allocation3], 0
    %s20 = scalar_lea.sflag [#allocation3], 1
    %21 = vsyncpa %s20, 0
    %22 = vsyncpa [#allocation6], 0
    %s23 = scalar_lea.sflag [#allocation6], 1
    %24 = vsyncpa %s23, 0
    %25 = vsyncpa [#allocation9], 0
    %26 = vsyncpa [#allocation12], 0
    %27 = vsyncpa [#allocation15], 0
    %28 = vsyncpa [#allocation18], 0
    %29 = vsyncpa [#allocation4], 0
    %s30 = scalar_lea.sflag [#allocation4], 1
    %31 = vsyncpa %s30, 0
    loop: start=0, step=1, limit=4
    $region2: #{encoder_layer_forward.1} parent=1 // loop_pre_header
      _
    $region3: #{encoder_layer_forward.1} parent=1 // loop_header
      %s33 = sphi 0, %s37
      %p34 = scmp.ge.s32.totalorder %s33, 4
      %s43 = sphi 0, %s45
      %s46 = sphi 0, %s43
      %s47 = sphi 0, %s46
      %s63 = sphi 0, %s47
      %s69 = sphi 0, %s71
      %s72 = sphi 0, %s69
      %s73 = sphi 0, %s72
      %s89 = sphi 0, %s73
      %s95 = sphi 0, %s97
      %s98 = sphi 0, %s95
      %s99 = sphi 0, %s98
      %s115 = sphi 0, %s99
      %s121 = sphi 0, %s123
      %s124 = sphi 0, %s121
      %s125 = sphi 0, %s124
      %s141 = sphi 0, %s125
      %s145 = sphi 0, %s145
      %s147 = sphi 0, %s145
      %s148 = sphi 0, %s147
      %s162 = sphi 0, %s148
      %s166 = sphi 0, %s166
      %s168 = sphi 0, %s166
      %s169 = sphi 0, %s168
      %s183 = sphi 0, %s169
      %s187 = sphi 0, %s187
      %s189 = sphi 0, %s187
      %s190 = sphi 0, %s189
      %s204 = sphi 0, %s190
      %s208 = sphi 0, %s208
      %s210 = sphi 0, %s208
      %s211 = sphi 0, %s210
      %s225 = sphi 0, %s211
      %s229 = sphi 0, %s229
      %s231 = sphi 0, %s229
      %s232 = sphi 0, %s231
      %s246 = sphi 0, %s232
      %s250 = sphi 0, %s250
      %s252 = sphi 0, %s250
      %s253 = sphi 0, %s252
      %s267 = sphi 0, %s253
      %s271 = sphi 0, %s271
      %s273 = sphi 0, %s271
      %s274 = sphi 0, %s273
      %s288 = sphi 0, %s274
      %s292 = sphi 0, %s292
      %s294 = sphi 0, %s292
      %s295 = sphi 0, %s294
      %s309 = sphi 0, %s295
      %s313 = sphi 0, %s313
      %s315 = sphi 0, %s313
      %s316 = sphi 0, %s315
      %s330 = sphi 0, %s316
      %s334 = sphi 0, %s334
      %s336 = sphi 0, %s334
      %s337 = sphi 0, %s336
      %s351 = sphi 0, %s337
      %s357 = sphi 0, %s359
      %s360 = sphi 0, %s357
      %s361 = sphi 0, %s360
      %s377 = sphi 0, %s361
    $region4: #{encoder_layer_forward.1} parent=1 // loop_header_branch
      %36 = sbr.rel (%p34) target = $region8
    $region5: #{encoder_layer_forward.1} parent=1 // loop_body
      %s38 = ssub.s32 %s33, 1
      %s39 = ssub.s32 %s33, 2
      %s40 = sadd.s32 %s33, 1
      %s41 = ssub.s32 %s33, %s40
      %p42 = scmp.eq.s32.totalorder %s41, 0
      %s44 = sadd.s32 %s43, 1
      %s45 = scalar_select %p42, %s43, %s44
      %p48 = pneg %p42
      %p49 = scmp.eq.s32.totalorder %s33, 1
      %p50 = por %p48, %p49
      %p51 = scmp.ne.s32.totalorder %s43, %s46
      %p52 = scmp.eq.s32.totalorder %s33, 0
      %p53 = por %p51, %p52
      %p54 = scmp.ne.s32.totalorder %s43, %s46
      %p55 = scmp.eq.s32.totalorder %s38, 1
      %p56 = por %p54, %p55
      %p57 = scmp.ne.s32.totalorder %s46, %s47
      %p58 = scmp.eq.s32.totalorder %s38, 0
      %p59 = por %p57, %p58
      %p60 = scmp.ne.s32.totalorder %s46, %s47
      %p61 = scmp.eq.s32.totalorder %s39, 1
      %p62 = por %p60, %p61
      %p64 = scmp.ne.s32.totalorder %s47, %s63
      %p65 = scmp.eq.s32.totalorder %s39, 0
      %p66 = por %p64, %p65
      %s67 = ssub.s32 %s33, %s40
      %p68 = scmp.eq.s32.totalorder %s67, 0
      %s70 = sadd.s32 %s69, 1
      %s71 = scalar_select %p68, %s69, %s70
      %p74 = pneg %p68
      %p75 = scmp.eq.s32.totalorder %s33, 1
      %p76 = por %p74, %p75
      %p77 = scmp.ne.s32.totalorder %s69, %s72
      %p78 = scmp.eq.s32.totalorder %s33, 0
      %p79 = por %p77, %p78
      %p80 = scmp.ne.s32.totalorder %s69, %s72
      %p81 = scmp.eq.s32.totalorder %s38, 1
      %p82 = por %p80, %p81
      %p83 = scmp.ne.s32.totalorder %s72, %s73
      %p84 = scmp.eq.s32.totalorder %s38, 0
      %p85 = por %p83, %p84
      %p86 = scmp.ne.s32.totalorder %s72, %s73
      %p87 = scmp.eq.s32.totalorder %s39, 1
      %p88 = por %p86, %p87
      %p90 = scmp.ne.s32.totalorder %s73, %s89
      %p91 = scmp.eq.s32.totalorder %s39, 0
      %p92 = por %p90, %p91
      %s93 = ssub.s32 %s33, %s40
      %p94 = scmp.eq.s32.totalorder %s93, 0
      %s96 = sadd.s32 %s95, 1
      %s97 = scalar_select %p94, %s95, %s96
      %p100 = pneg %p94
      %p101 = scmp.eq.s32.totalorder %s33, 1
      %p102 = por %p100, %p101
      %p103 = scmp.ne.s32.totalorder %s95, %s98
      %p104 = scmp.eq.s32.totalorder %s33, 0
      %p105 = por %p103, %p104
      %p106 = scmp.ne.s32.totalorder %s95, %s98
      %p107 = scmp.eq.s32.totalorder %s38, 1
      %p108 = por %p106, %p107
      %p109 = scmp.ne.s32.totalorder %s98, %s99
      %p110 = scmp.eq.s32.totalorder %s38, 0
      %p111 = por %p109, %p110
      %p112 = scmp.ne.s32.totalorder %s98, %s99
      %p113 = scmp.eq.s32.totalorder %s39, 1
      %p114 = por %p112, %p113
      %p116 = scmp.ne.s32.totalorder %s99, %s115
      %p117 = scmp.eq.s32.totalorder %s39, 0
      %p118 = por %p116, %p117
      %s119 = ssub.s32 %s33, %s40
      %p120 = scmp.eq.s32.totalorder %s119, 0
      %s122 = sadd.s32 %s121, 1
      %s123 = scalar_select %p120, %s121, %s122
      %p126 = pneg %p120
      %p127 = scmp.eq.s32.totalorder %s33, 1
      %p128 = por %p126, %p127
      %p129 = scmp.ne.s32.totalorder %s121, %s124
      %p130 = scmp.eq.s32.totalorder %s33, 0
      %p131 = por %p129, %p130
      %p132 = scmp.ne.s32.totalorder %s121, %s124
      %p133 = scmp.eq.s32.totalorder %s38, 1
      %p134 = por %p132, %p133
      %p135 = scmp.ne.s32.totalorder %s124, %s125
      %p136 = scmp.eq.s32.totalorder %s38, 0
      %p137 = por %p135, %p136
      %p138 = scmp.ne.s32.totalorder %s124, %s125
      %p139 = scmp.eq.s32.totalorder %s39, 1
      %p140 = por %p138, %p139
      %p142 = scmp.ne.s32.totalorder %s125, %s141
      %p143 = scmp.eq.s32.totalorder %s39, 0
      %p144 = por %p142, %p143
      %s146 = sadd.s32 %s145, 1
      %p149 = scmp.eq.s32.totalorder %s33, 1
      %p150 = scmp.ne.s32.totalorder %s145, %s147
      %p151 = scmp.eq.s32.totalorder %s33, 0
      %p152 = por %p150, %p151
      %p153 = scmp.ne.s32.totalorder %s145, %s147
      %p154 = scmp.eq.s32.totalorder %s38, 1
      %p155 = por %p153, %p154
      %p156 = scmp.ne.s32.totalorder %s147, %s148
      %p157 = scmp.eq.s32.totalorder %s38, 0
      %p158 = por %p156, %p157
      %p159 = scmp.ne.s32.totalorder %s147, %s148
      %p160 = scmp.eq.s32.totalorder %s39, 1
      %p161 = por %p159, %p160
      %p163 = scmp.ne.s32.totalorder %s148, %s162
      %p164 = scmp.eq.s32.totalorder %s39, 0
      %p165 = por %p163, %p164
      %s167 = sadd.s32 %s166, 1
      %p170 = scmp.eq.s32.totalorder %s33, 1
      %p171 = scmp.ne.s32.totalorder %s166, %s168
      %p172 = scmp.eq.s32.totalorder %s33, 0
      %p173 = por %p171, %p172
      %p174 = scmp.ne.s32.totalorder %s166, %s168
      %p175 = scmp.eq.s32.totalorder %s38, 1
      %p176 = por %p174, %p175
      %p177 = scmp.ne.s32.totalorder %s168, %s169
      %p178 = scmp.eq.s32.totalorder %s38, 0
      %p179 = por %p177, %p178
      %p180 = scmp.ne.s32.totalorder %s168, %s169
      %p181 = scmp.eq.s32.totalorder %s39, 1
      %p182 = por %p180, %p181
      %p184 = scmp.ne.s32.totalorder %s169, %s183
      %p185 = scmp.eq.s32.totalorder %s39, 0
      %p186 = por %p184, %p185
      %s188 = sadd.s32 %s187, 1
      %p191 = scmp.eq.s32.totalorder %s33, 1
      %p192 = scmp.ne.s32.totalorder %s187, %s189
      %p193 = scmp.eq.s32.totalorder %s33, 0
      %p194 = por %p192, %p193
      %p195 = scmp.ne.s32.totalorder %s187, %s189
      %p196 = scmp.eq.s32.totalorder %s38, 1
      %p197 = por %p195, %p196
      %p198 = scmp.ne.s32.totalorder %s189, %s190
      %p199 = scmp.eq.s32.totalorder %s38, 0
      %p200 = por %p198, %p199
      %p201 = scmp.ne.s32.totalorder %s189, %s190
      %p202 = scmp.eq.s32.totalorder %s39, 1
      %p203 = por %p201, %p202
      %p205 = scmp.ne.s32.totalorder %s190, %s204
      %p206 = scmp.eq.s32.totalorder %s39, 0
      %p207 = por %p205, %p206
      %s209 = sadd.s32 %s208, 1
      %p212 = scmp.eq.s32.totalorder %s33, 1
      %p213 = scmp.ne.s32.totalorder %s208, %s210
      %p214 = scmp.eq.s32.totalorder %s33, 0
      %p215 = por %p213, %p214
      %p216 = scmp.ne.s32.totalorder %s208, %s210
      %p217 = scmp.eq.s32.totalorder %s38, 1
      %p218 = por %p216, %p217
      %p219 = scmp.ne.s32.totalorder %s210, %s211
      %p220 = scmp.eq.s32.totalorder %s38, 0
      %p221 = por %p219, %p220
      %p222 = scmp.ne.s32.totalorder %s210, %s211
      %p223 = scmp.eq.s32.totalorder %s39, 1
      %p224 = por %p222, %p223
      %p226 = scmp.ne.s32.totalorder %s211, %s225
      %p227 = scmp.eq.s32.totalorder %s39, 0
      %p228 = por %p226, %p227
      %s230 = sadd.s32 %s229, 1
      %p233 = scmp.eq.s32.totalorder %s33, 1
      %p234 = scmp.ne.s32.totalorder %s229, %s231
      %p235 = scmp.eq.s32.totalorder %s33, 0
      %p236 = por %p234, %p235
      %p237 = scmp.ne.s32.totalorder %s229, %s231
      %p238 = scmp.eq.s32.totalorder %s38, 1
      %p239 = por %p237, %p238
      %p240 = scmp.ne.s32.totalorder %s231, %s232
      %p241 = scmp.eq.s32.totalorder %s38, 0
      %p242 = por %p240, %p241
      %p243 = scmp.ne.s32.totalorder %s231, %s232
      %p244 = scmp.eq.s32.totalorder %s39, 1
      %p245 = por %p243, %p244
      %p247 = scmp.ne.s32.totalorder %s232, %s246
      %p248 = scmp.eq.s32.totalorder %s39, 0
      %p249 = por %p247, %p248
      %s251 = sadd.s32 %s250, 1
      %p254 = scmp.eq.s32.totalorder %s33, 1
      %p255 = scmp.ne.s32.totalorder %s250, %s252
      %p256 = scmp.eq.s32.totalorder %s33, 0
      %p257 = por %p255, %p256
      %p258 = scmp.ne.s32.totalorder %s250, %s252
      %p259 = scmp.eq.s32.totalorder %s38, 1
      %p260 = por %p258, %p259
      %p261 = scmp.ne.s32.totalorder %s252, %s253
      %p262 = scmp.eq.s32.totalorder %s38, 0
      %p263 = por %p261, %p262
      %p264 = scmp.ne.s32.totalorder %s252, %s253
      %p265 = scmp.eq.s32.totalorder %s39, 1
      %p266 = por %p264, %p265
      %p268 = scmp.ne.s32.totalorder %s253, %s267
      %p269 = scmp.eq.s32.totalorder %s39, 0
      %p270 = por %p268, %p269
      %s272 = sadd.s32 %s271, 1
      %p275 = scmp.eq.s32.totalorder %s33, 1
      %p276 = scmp.ne.s32.totalorder %s271, %s273
      %p277 = scmp.eq.s32.totalorder %s33, 0
      %p278 = por %p276, %p277
      %p279 = scmp.ne.s32.totalorder %s271, %s273
      %p280 = scmp.eq.s32.totalorder %s38, 1
      %p281 = por %p279, %p280
      %p282 = scmp.ne.s32.totalorder %s273, %s274
      %p283 = scmp.eq.s32.totalorder %s38, 0
      %p284 = por %p282, %p283
      %p285 = scmp.ne.s32.totalorder %s273, %s274
      %p286 = scmp.eq.s32.totalorder %s39, 1
      %p287 = por %p285, %p286
      %p289 = scmp.ne.s32.totalorder %s274, %s288
      %p290 = scmp.eq.s32.totalorder %s39, 0
      %p291 = por %p289, %p290
      %s293 = sadd.s32 %s292, 1
      %p296 = scmp.eq.s32.totalorder %s33, 1
      %p297 = scmp.ne.s32.totalorder %s292, %s294
      %p298 = scmp.eq.s32.totalorder %s33, 0
      %p299 = por %p297, %p298
      %p300 = scmp.ne.s32.totalorder %s292, %s294
      %p301 = scmp.eq.s32.totalorder %s38, 1
      %p302 = por %p300, %p301
      %p303 = scmp.ne.s32.totalorder %s294, %s295
      %p304 = scmp.eq.s32.totalorder %s38, 0
      %p305 = por %p303, %p304
      %p306 = scmp.ne.s32.totalorder %s294, %s295
      %p307 = scmp.eq.s32.totalorder %s39, 1
      %p308 = por %p306, %p307
      %p310 = scmp.ne.s32.totalorder %s295, %s309
      %p311 = scmp.eq.s32.totalorder %s39, 0
      %p312 = por %p310, %p311
      %s314 = sadd.s32 %s313, 1
      %p317 = scmp.eq.s32.totalorder %s33, 1
      %p318 = scmp.ne.s32.totalorder %s313, %s315
      %p319 = scmp.eq.s32.totalorder %s33, 0
      %p320 = por %p318, %p319
      %p321 = scmp.ne.s32.totalorder %s313, %s315
      %p322 = scmp.eq.s32.totalorder %s38, 1
      %p323 = por %p321, %p322
      %p324 = scmp.ne.s32.totalorder %s315, %s316
      %p325 = scmp.eq.s32.totalorder %s38, 0
      %p326 = por %p324, %p325
      %p327 = scmp.ne.s32.totalorder %s315, %s316
      %p328 = scmp.eq.s32.totalorder %s39, 1
      %p329 = por %p327, %p328
      %p331 = scmp.ne.s32.totalorder %s316, %s330
      %p332 = scmp.eq.s32.totalorder %s39, 0
      %p333 = por %p331, %p332
      %s335 = sadd.s32 %s334, 1
      %p338 = scmp.eq.s32.totalorder %s33, 1
      %p339 = scmp.ne.s32.totalorder %s334, %s336
      %p340 = scmp.eq.s32.totalorder %s33, 0
      %p341 = por %p339, %p340
      %p342 = scmp.ne.s32.totalorder %s334, %s336
      %p343 = scmp.eq.s32.totalorder %s38, 1
      %p344 = por %p342, %p343
      %p345 = scmp.ne.s32.totalorder %s336, %s337
      %p346 = scmp.eq.s32.totalorder %s38, 0
      %p347 = por %p345, %p346
      %p348 = scmp.ne.s32.totalorder %s336, %s337
      %p349 = scmp.eq.s32.totalorder %s39, 1
      %p350 = por %p348, %p349
      %p352 = scmp.ne.s32.totalorder %s337, %s351
      %p353 = scmp.eq.s32.totalorder %s39, 0
      %p354 = por %p352, %p353
      %s355 = ssub.s32 %s33, %s40
      %p356 = scmp.eq.s32.totalorder %s355, 0
      %s358 = sadd.s32 %s357, 1
      %s359 = scalar_select %p356, %s357, %s358
      %p362 = pneg %p356
      %p363 = scmp.eq.s32.totalorder %s33, 1
      %p364 = por %p362, %p363
      %p365 = scmp.ne.s32.totalorder %s357, %s360
      %p366 = scmp.eq.s32.totalorder %s33, 0
      %p367 = por %p365, %p366
      %p368 = scmp.ne.s32.totalorder %s357, %s360
      %p369 = scmp.eq.s32.totalorder %s38, 1
      %p370 = por %p368, %p369
      %p371 = scmp.ne.s32.totalorder %s360, %s361
      %p372 = scmp.eq.s32.totalorder %s38, 0
      %p373 = por %p371, %p372
      %p374 = scmp.ne.s32.totalorder %s360, %s361
      %p375 = scmp.eq.s32.totalorder %s39, 1
      %p376 = por %p374, %p375
      %p378 = scmp.ne.s32.totalorder %s361, %s377
      %p379 = scmp.eq.s32.totalorder %s39, 0
      %p380 = por %p378, %p379
      %p381 = scmp.le.s32.totalorder 1, %s33
      %p382 = scmp.lt.s32.totalorder %s33, 3
      %p383 = pnand %p381, %p382
      %p384 = pneg %p383
      // Predicated region
      $region9: #{encoder_layer_forward.1} parent=5 // pred_check
        _
      $region10: #{encoder_layer_forward.1} parent=5 // pred_check_branch
        %386 = sbr.rel (%p383) target = $region12
      $region11: #{encoder_layer_forward.1} parent=5 // pred_region
        %s387 = ssub.s32 %s33, 1
        // Predicated region
        $region13: #{encoder_layer_forward.1} parent=11 // pred_check
          %p388 = pneg %p158
        $region14: #{encoder_layer_forward.1} parent=11 // pred_check_branch
          %390 = sbr.rel (%p388) target = $region16
        $region15: #{encoder_layer_forward.1} parent=11 // pred_region
          %s392 = ssub.s32 2048, 2048
          %393 = vsyncadd [#allocation9], %s392
          %s394 = sshll.u32 [#allocation8], 4
          %s395 = int_to_ptr.vmem [resolvable:$true] %s394
          %400 = dma.hbm_to_vmem [thread:$0]  %s4, 2048, %s395, [#allocation9], 128, 128, 8
        $region16: #{encoder_layer_forward.1} parent=11 // pred_fallthru
          _
        // Predicated region
        $region17: #{encoder_layer_forward.1} parent=11 // pred_check
          %p401 = pneg %p179
        $region18: #{encoder_layer_forward.1} parent=11 // pred_check_branch
          %403 = sbr.rel (%p401) target = $region20
        $region19: #{encoder_layer_forward.1} parent=11 // pred_region
          %s405 = ssub.s32 2048, 2048
          %406 = vsyncadd [#allocation9], %s405
          %s407 = sshll.u32 [#allocation10], 4
          %s408 = int_to_ptr.vmem [resolvable:$true] %s407
          %413 = dma.hbm_to_vmem [thread:$0]  %s5, 2048, %s408, [#allocation9], 128, 128, 8
        $region20: #{encoder_layer_forward.1} parent=11 // pred_fallthru
          _
        // Predicated region
        $region21: #{encoder_layer_forward.1} parent=11 // pred_check
          %p414 = pneg %p200
        $region22: #{encoder_layer_forward.1} parent=11 // pred_check_branch
          %416 = sbr.rel (%p414) target = $region24
        $region23: #{encoder_layer_forward.1} parent=11 // pred_region
          _
        $region24: #{encoder_layer_forward.1} parent=11 // pred_fallthru
          _
        // Predicated region
        $region25: #{encoder_layer_forward.1} parent=11 // pred_check
          %p417 = pneg %p221
        $region26: #{encoder_layer_forward.1} parent=11 // pred_check_branch
          %419 = sbr.rel (%p417) target = $region28
        $region27: #{encoder_layer_forward.1} parent=11 // pred_region
          _
        $region28: #{encoder_layer_forward.1} parent=11 // pred_fallthru
          _
        // Predicated region
        $region29: #{encoder_layer_forward.1} parent=11 // pred_check
          %p420 = pneg %p242
        $region30: #{encoder_layer_forward.1} parent=11 // pred_check_branch
          %422 = sbr.rel (%p420) target = $region32
        $region31: #{encoder_layer_forward.1} parent=11 // pred_region
          %s424 = ssub.s32 4096, 4096
          %425 = vsyncadd [#allocation12], %s424
          %s426 = sshll.u32 [#allocation11], 4
          %s427 = int_to_ptr.vmem [resolvable:$true] %s426
          %432 = dma.hbm_to_vmem [thread:$0]  %s8, 4096, %s427, [#allocation12], 256, 256, 16
        $region32: #{encoder_layer_forward.1} parent=11 // pred_fallthru
          _
        // Predicated region
        $region33: #{encoder_layer_forward.1} parent=11 // pred_check
          %p433 = pneg %p263
        $region34: #{encoder_layer_forward.1} parent=11 // pred_check_branch
          %435 = sbr.rel (%p433) target = $region36
        $region35: #{encoder_layer_forward.1} parent=11 // pred_region
          %s437 = ssub.s32 32, 32
          %438 = vsyncadd [#allocation12], %s437
          %s440 = sshll.u32 [#allocation13], 4
          %s441 = int_to_ptr.vmem [resolvable:$true] %s440
          %443 = dma.hbm_to_vmem [thread:$0]  %s9, 32, %s441, [#allocation12]
        $region36: #{encoder_layer_forward.1} parent=11 // pred_fallthru
          _
        // Predicated region
        $region37: #{encoder_layer_forward.1} parent=11 // pred_check
          %p444 = pneg %p284
        $region38: #{encoder_layer_forward.1} parent=11 // pred_check_branch
          %446 = sbr.rel (%p444) target = $region40
        $region39: #{encoder_layer_forward.1} parent=11 // pred_region
          %s448 = ssub.s32 4096, 4096
          %449 = vsyncadd [#allocation15], %s448
          %s450 = sshll.u32 [#allocation14], 4
          %s451 = int_to_ptr.vmem [resolvable:$true] %s450
          %456 = dma.hbm_to_vmem [thread:$0]  %s10, 4096, %s451, [#allocation15], 128, 128, 8
        $region40: #{encoder_layer_forward.1} parent=11 // pred_fallthru
          _
        // Predicated region
        $region41: #{encoder_layer_forward.1} parent=11 // pred_check
          %p457 = pneg %p305
        $region42: #{encoder_layer_forward.1} parent=11 // pred_check_branch
          %459 = sbr.rel (%p457) target = $region44
        $region43: #{encoder_layer_forward.1} parent=11 // pred_region
          %s461 = ssub.s32 16, 16
          %462 = vsyncadd [#allocation15], %s461
          %s464 = sshll.u32 [#allocation16], 4
          %s465 = int_to_ptr.vmem [resolvable:$true] %s464
          %467 = dma.hbm_to_vmem [thread:$0]  %s11, 16, %s465, [#allocation15]
        $region44: #{encoder_layer_forward.1} parent=11 // pred_fallthru
          _
        // Predicated region
        $region45: #{encoder_layer_forward.1} parent=11 // pred_check
          %p468 = pneg %p326
        $region46: #{encoder_layer_forward.1} parent=11 // pred_check_branch
          %470 = sbr.rel (%p468) target = $region48
        $region47: #{encoder_layer_forward.1} parent=11 // pred_region
          %s472 = ssub.s32 16, 16
          %473 = vsyncadd [#allocation18], %s472
          %s475 = sshll.u32 [#allocation17], 4
          %s476 = int_to_ptr.vmem [resolvable:$true] %s475
          %478 = dma.hbm_to_vmem [thread:$0]  %s12, 16, %s476, [#allocation18]
        $region48: #{encoder_layer_forward.1} parent=11 // pred_fallthru
          _
        // Predicated region
        $region49: #{encoder_layer_forward.1} parent=11 // pred_check
          %p479 = pneg %p347
        $region50: #{encoder_layer_forward.1} parent=11 // pred_check_branch
          %481 = sbr.rel (%p479) target = $region52
        $region51: #{encoder_layer_forward.1} parent=11 // pred_region
          %s483 = ssub.s32 16, 16
          %484 = vsyncadd [#allocation18], %s483
          %s486 = sshll.u32 [#allocation19], 4
          %s487 = int_to_ptr.vmem [resolvable:$true] %s486
          %489 = dma.hbm_to_vmem [thread:$0]  %s13, 16, %s487, [#allocation18]
        $region52: #{encoder_layer_forward.1} parent=11 // pred_fallthru
          _
      $region12: #{encoder_layer_forward.1} parent=5 // pred_fallthru
        _
      %p490 = scmp.lt.s32.totalorder %s33, 2
      // Predicated region
      $region53: #{encoder_layer_forward.1} parent=5 // pred_check
        %p491 = pneg %p490
      $region54: #{encoder_layer_forward.1} parent=5 // pred_check_branch
        %493 = sbr.rel (%p491) target = $region56
      $region55: #{encoder_layer_forward.1} parent=5 // pred_region
        // Predicated region
        $region57: #{encoder_layer_forward.1} parent=55 // pred_check
          %p494 = pneg %p53
        $region58: #{encoder_layer_forward.1} parent=55 // pred_check_branch
          %496 = sbr.rel (%p494) target = $region60
        $region59: #{encoder_layer_forward.1} parent=55 // pred_region
          %p497 = scmp.lt.s32.totalorder %s33, 1
          %s498 = scalar_select %p497, %s33, 1
          %s499 = smul.addr %s498, 8
          %s500 = scalar_lea.vmem %s0, %s499
        $region60: #{encoder_layer_forward.1} parent=55 // pred_fallthru
          _
        // Predicated region
        $region61: #{encoder_layer_forward.1} parent=55 // pred_check
          %p501 = pneg %p79
        $region62: #{encoder_layer_forward.1} parent=55 // pred_check_branch
          %503 = sbr.rel (%p501) target = $region64
        $region63: #{encoder_layer_forward.1} parent=55 // pred_region
          %s504 = sand.u32 %s69, 1
          %s505 = scalar_lea.sflag [#allocation3], %s504
          %s506 = sand.u32 %s69, 1
          %s507 = smul.addr %s506, 8
          %s508 = scalar_lea.vmem [#allocation2], %s507
          %s510 = ssub.s32 128, 128
          %511 = vsyncadd %s505, %s510
          %s512 = smul.addr %s33, 128
          %s513 = scalar_lea.hbm %s1, %s512
          %s515 = sshll.u32 %s508, 4
          %s516 = int_to_ptr.vmem [resolvable:$true] %s515
          %518 = dma.hbm_to_vmem [thread:$0]  %s513, 128, %s516, %s505
        $region64: #{encoder_layer_forward.1} parent=55 // pred_fallthru
          _
        // Predicated region
        $region65: #{encoder_layer_forward.1} parent=55 // pred_check
          %p519 = pneg %p105
        $region66: #{encoder_layer_forward.1} parent=55 // pred_check_branch
          %521 = sbr.rel (%p519) target = $region68
        $region67: #{encoder_layer_forward.1} parent=55 // pred_region
          %s522 = sand.u32 %s33, 1
          %s523 = scalar_lea.sflag [#allocation6], %s522
          %s524 = sand.u32 %s95, 1
          %s525 = smul.addr %s524, 8
          %s526 = scalar_lea.vmem [#allocation5], %s525
          %s528 = ssub.s32 128, 128
          %529 = vsyncadd %s523, %s528
          %s530 = smul.addr %s33, 128
          %s531 = scalar_lea.hbm %s2, %s530
          %s533 = sshll.u32 %s526, 4
          %s534 = int_to_ptr.vmem [resolvable:$true] %s533
          %536 = dma.hbm_to_vmem [thread:$0]  %s531, 128, %s534, %s523
        $region68: #{encoder_layer_forward.1} parent=55 // pred_fallthru
          _
        // Predicated region
        $region69: #{encoder_layer_forward.1} parent=55 // pred_check
          %p537 = pneg %p131
        $region70: #{encoder_layer_forward.1} parent=55 // pred_check_branch
          %539 = sbr.rel (%p537) target = $region72
        $region71: #{encoder_layer_forward.1} parent=55 // pred_region
          %s540 = sand.u32 %s33, 1
          %s541 = scalar_lea.sflag [#allocation6], %s540
          %s542 = sand.u32 %s121, 1
          %s543 = smul.addr %s542, 8
          %s544 = scalar_lea.vmem [#allocation7], %s543
          %s546 = ssub.s32 128, 128
          %547 = vsyncadd %s541, %s546
          %s548 = smul.addr %s33, 128
          %s549 = scalar_lea.hbm %s3, %s548
          %s551 = sshll.u32 %s544, 4
          %s552 = int_to_ptr.vmem [resolvable:$true] %s551
          %554 = dma.hbm_to_vmem [thread:$0]  %s549, 128, %s552, %s541
        $region72: #{encoder_layer_forward.1} parent=55 // pred_fallthru
          _
      $region56: #{encoder_layer_forward.1} parent=5 // pred_fallthru
        _
      %p555 = scmp.le.s32.totalorder 1, %s33
      %p556 = scmp.lt.s32.totalorder %s33, 3
      %p557 = pnand %p555, %p556
      %p558 = pneg %p557
      // Predicated region
      $region73: #{encoder_layer_forward.1} parent=5 // pred_check
        _
      $region74: #{encoder_layer_forward.1} parent=5 // pred_check_branch
        %560 = sbr.rel (%p557) target = $region76
      $region75: #{encoder_layer_forward.1} parent=5 // pred_region
        %s561 = ssub.s32 %s33, 1
        %s562 = sand.u32 %s72, 1
        %s563 = scalar_lea.sflag [#allocation3], %s562
        %s564 = sand.u32 %s72, 1
        %s565 = smul.addr %s564, 8
        %s566 = scalar_lea.vmem [#allocation2], %s565
        // Predicated region
        $region77: #{encoder_layer_forward.1} parent=75 // pred_check
          %p567 = pneg %p85
        $region78: #{encoder_layer_forward.1} parent=75 // pred_check_branch
          %569 = sbr.rel (%p567) target = $region80
        $region79: #{encoder_layer_forward.1} parent=75 // pred_region
          %570 = dma.done %s563, 128
        $region80: #{encoder_layer_forward.1} parent=75 // pred_fallthru
          _
        %s571 = sand.u32 %s38, 1
        %s572 = scalar_lea.sflag [#allocation6], %s571
        %s573 = sand.u32 %s98, 1
        %s574 = smul.addr %s573, 8
        %s575 = scalar_lea.vmem [#allocation5], %s574
        // Predicated region
        $region81: #{encoder_layer_forward.1} parent=75 // pred_check
          %p576 = pneg %p111
        $region82: #{encoder_layer_forward.1} parent=75 // pred_check_branch
          %578 = sbr.rel (%p576) target = $region84
        $region83: #{encoder_layer_forward.1} parent=75 // pred_region
          %579 = dma.done %s572, 128
        $region84: #{encoder_layer_forward.1} parent=75 // pred_fallthru
          _
        %s580 = sand.u32 %s38, 1
        %s581 = scalar_lea.sflag [#allocation6], %s580
        %s582 = sand.u32 %s124, 1
        %s583 = smul.addr %s582, 8
        %s584 = scalar_lea.vmem [#allocation7], %s583
        // Predicated region
        $region85: #{encoder_layer_forward.1} parent=75 // pred_check
          %p585 = pneg %p137
        $region86: #{encoder_layer_forward.1} parent=75 // pred_check_branch
          %587 = sbr.rel (%p585) target = $region88
        $region87: #{encoder_layer_forward.1} parent=75 // pred_region
          %588 = dma.done %s581, 128
        $region88: #{encoder_layer_forward.1} parent=75 // pred_fallthru
          _
        // Predicated region
        $region89: #{encoder_layer_forward.1} parent=75 // pred_check
          %p589 = pneg %p158
        $region90: #{encoder_layer_forward.1} parent=75 // pred_check_branch
          %591 = sbr.rel (%p589) target = $region92
        $region91: #{encoder_layer_forward.1} parent=75 // pred_region
          %592 = dma.done [#allocation9], 2048
        $region92: #{encoder_layer_forward.1} parent=75 // pred_fallthru
          _
        // Predicated region
        $region93: #{encoder_layer_forward.1} parent=75 // pred_check
          %p593 = pneg %p179
        $region94: #{encoder_layer_forward.1} parent=75 // pred_check_branch
          %595 = sbr.rel (%p593) target = $region96
        $region95: #{encoder_layer_forward.1} parent=75 // pred_region
          %596 = dma.done [#allocation9], 2048
        $region96: #{encoder_layer_forward.1} parent=75 // pred_fallthru
          _
        // Predicated region
        $region97: #{encoder_layer_forward.1} parent=75 // pred_check
          %p597 = pneg %p242
        $region98: #{encoder_layer_forward.1} parent=75 // pred_check_branch
          %599 = sbr.rel (%p597) target = $region100
        $region99: #{encoder_layer_forward.1} parent=75 // pred_region
          %600 = dma.done [#allocation12], 4096
        $region100: #{encoder_layer_forward.1} parent=75 // pred_fallthru
          _
        // Predicated region
        $region101: #{encoder_layer_forward.1} parent=75 // pred_check
          %p601 = pneg %p263
        $region102: #{encoder_layer_forward.1} parent=75 // pred_check_branch
          %603 = sbr.rel (%p601) target = $region104
        $region103: #{encoder_layer_forward.1} parent=75 // pred_region
          %604 = dma.done [#allocation12], 32
        $region104: #{encoder_layer_forward.1} parent=75 // pred_fallthru
          _
        // Predicated region
        $region105: #{encoder_layer_forward.1} parent=75 // pred_check
          %p605 = pneg %p284
        $region106: #{encoder_layer_forward.1} parent=75 // pred_check_branch
          %607 = sbr.rel (%p605) target = $region108
        $region107: #{encoder_layer_forward.1} parent=75 // pred_region
          %608 = dma.done [#allocation15], 4096
        $region108: #{encoder_layer_forward.1} parent=75 // pred_fallthru
          _
        // Predicated region
        $region109: #{encoder_layer_forward.1} parent=75 // pred_check
          %p609 = pneg %p305
        $region110: #{encoder_layer_forward.1} parent=75 // pred_check_branch
          %611 = sbr.rel (%p609) target = $region112
        $region111: #{encoder_layer_forward.1} parent=75 // pred_region
          %612 = dma.done [#allocation15], 16
        $region112: #{encoder_layer_forward.1} parent=75 // pred_fallthru
          _
        // Predicated region
        $region113: #{encoder_layer_forward.1} parent=75 // pred_check
          %p613 = pneg %p326
        $region114: #{encoder_layer_forward.1} parent=75 // pred_check_branch
          %615 = sbr.rel (%p613) target = $region116
        $region115: #{encoder_layer_forward.1} parent=75 // pred_region
          %616 = dma.done [#allocation18], 16
        $region116: #{encoder_layer_forward.1} parent=75 // pred_fallthru
          _
        // Predicated region
        $region117: #{encoder_layer_forward.1} parent=75 // pred_check
          %p617 = pneg %p347
        $region118: #{encoder_layer_forward.1} parent=75 // pred_check_branch
          %619 = sbr.rel (%p617) target = $region120
        $region119: #{encoder_layer_forward.1} parent=75 // pred_region
          %620 = dma.done [#allocation18], 16
        $region120: #{encoder_layer_forward.1} parent=75 // pred_fallthru
          _
        %p621 = scmp.lt.s32.totalorder %s38, 1
        %s622 = scalar_select %p621, %s38, 1
        %s623 = smul.addr %s622, 8
        %s624 = scalar_lea.vmem %s0, %s623
        %p625 = pneg %p59
        %p626 = pneg %p56
        %s627 = sand.u32 %s72, 1
        %s628 = scalar_lea.sflag [#allocation3], %s627
        %s629 = sand.u32 %s72, 1
        %s630 = smul.addr %s629, 8
        %s631 = scalar_lea.vmem [#allocation2], %s630
        %p632 = pneg %p85
        %p633 = pneg %p82
        %s634 = sand.u32 %s38, 1
        %s635 = scalar_lea.sflag [#allocation6], %s634
        %s636 = sand.u32 %s98, 1
        %s637 = smul.addr %s636, 8
        %s638 = scalar_lea.vmem [#allocation5], %s637
        %p639 = pneg %p111
        %p640 = pneg %p108
        %s641 = sand.u32 %s38, 1
        %s642 = scalar_lea.sflag [#allocation6], %s641
        %s643 = sand.u32 %s124, 1
        %s644 = smul.addr %s643, 8
        %s645 = scalar_lea.vmem [#allocation7], %s644
        %p646 = pneg %p137
        %p647 = pneg %p134
        %p648 = pneg %p158
        %p649 = pneg %p155
        %p650 = pneg %p179
        %p651 = pneg %p176
        %p652 = pneg %p200
        %p653 = pneg %p197
        %p654 = pneg %p221
        %p655 = pneg %p218
        %p656 = pneg %p242
        %p657 = pneg %p239
        %p658 = pneg %p263
        %p659 = pneg %p260
        %p660 = pneg %p284
        %p661 = pneg %p281
        %p662 = pneg %p305
        %p663 = pneg %p302
        %p664 = pneg %p326
        %p665 = pneg %p323
        %p666 = pneg %p347
        %p667 = pneg %p344
        %p668 = pneg %p373
        %p669 = pneg %p370
        %s670 = sand.u32 %s360, 1
        %s671 = scalar_lea.sflag [#allocation4], %s670
        %s672 = sand.u32 %s360, 1
        %s673 = smul.addr %s672, 8
        %s674 = scalar_lea.vmem [#allocation20], %s673
        %p675 = scmp.lt.s32.totalorder %s38, 1
        %s676 = scalar_select %p675, %s38, 1
        %s677 = smul.addr %s676, 8
        %s678 = scalar_lea.vmem %s0, %s677
        %v679 = vld [vmem:[%s678] sm:$0xff]
        %v680 = vld [vmem:[%s566] sm:$0xff]
        %v681 = vld [vmem:[%s575] sm:$0xff]
        %v682 = vld [vmem:[%s584] sm:$0xff]
        %v683 = vld [vmem:[#allocation8] sm:$0xff]
        %v684 = vld [vmem:[#allocation8 + $0x8] sm:$0xff]
        %v685 = vld [vmem:[#allocation8 + $0x10] sm:$0xff]
        %v686 = vld [vmem:[#allocation8 + $0x18] sm:$0xff]
        %v687 = vld [vmem:[#allocation8 + $0x20] sm:$0xff]
        %v688 = vld [vmem:[#allocation8 + $0x28] sm:$0xff]
        %v689 = vld [vmem:[#allocation8 + $0x30] sm:$0xff]
        %v690 = vld [vmem:[#allocation8 + $0x38] sm:$0xff]
        %v691 = vld [vmem:[#allocation8 + $0x40] sm:$0xff]
        %v692 = vld [vmem:[#allocation8 + $0x48] sm:$0xff]
        %v693 = vld [vmem:[#allocation8 + $0x50] sm:$0xff]
        %v694 = vld [vmem:[#allocation8 + $0x58] sm:$0xff]
        %v695 = vld [vmem:[#allocation8 + $0x60] sm:$0xff]
        %v696 = vld [vmem:[#allocation8 + $0x68] sm:$0xff]
        %v697 = vld [vmem:[#allocation8 + $0x70] sm:$0xff]
        %v698 = vld [vmem:[#allocation8 + $0x78] sm:$0xff]
        %699 = vmatprep.subr.mxu0 0.0
        %700 = vmatpush1.msra.mxu0 %v698
        %701 = vmatprep.subr.mxu0 0.0
        %702 = vmatpush1.msra.mxu0 %v697
        %703 = vmatprep.subr.mxu0 0.0
        %704 = vmatpush1.msra.mxu0 %v696
        %705 = vmatprep.subr.mxu0 0.0
        %706 = vmatpush1.msra.mxu0 %v695
        %707 = vmatprep.subr.mxu0 0.0
        %708 = vmatpush1.msra.mxu0 %v694
        %709 = vmatprep.subr.mxu0 0.0
        %710 = vmatpush1.msra.mxu0 %v693
        %711 = vmatprep.subr.mxu0 0.0
        %712 = vmatpush1.msra.mxu0 %v692
        %713 = vmatprep.subr.mxu0 0.0
        %714 = vmatpush1.msra.mxu0 %v691
        %715 = vmatprep.subr.mxu0 0.0
        %716 = vmatpush1.msra.mxu0 %v690
        %717 = vmatprep.subr.mxu0 0.0
        %718 = vmatpush1.msra.mxu0 %v689
        %719 = vmatprep.subr.mxu0 0.0
        %720 = vmatpush1.msra.mxu0 %v688
        %721 = vmatprep.subr.mxu0 0.0
        %722 = vmatpush1.msra.mxu0 %v687
        %723 = vmatprep.subr.mxu0 0.0
        %724 = vmatpush1.msra.mxu0 %v686
        %725 = vmatprep.subr.mxu0 0.0
        %726 = vmatpush1.msra.mxu0 %v685
        %727 = vmatprep.subr.mxu0 0.0
        %728 = vmatpush1.msra.mxu0 %v684
        %729 = vmatprep.subr.mxu0 0.0
        %730 = vmatpush1.msra.mxu0 %v683
        %731 = vmatprep.subr.mxu0 0.0
        %732 = vmatpush2.msra.mxu0 0.0
        %733 = vmatprep.subr.mxu0 0.0
        %734 = vmatpush2.msra.mxu0 0.0
        %735 = vmatprep.subr.mxu0 0.0
        %736 = vmatpush2.msra.mxu0 0.0
        %737 = vmatprep.subr.mxu0 0.0
        %738 = vmatpush2.msra.mxu0 0.0
        %739 = vmatprep.subr.mxu0 0.0
        %740 = vmatpush2.msra.mxu0 0.0
        %741 = vmatprep.subr.mxu0 0.0
        %742 = vmatpush2.msra.mxu0 0.0
        %743 = vmatprep.subr.mxu0 0.0
        %744 = vmatpush2.msra.mxu0 0.0
        %745 = vmatprep.subr.mxu0 0.0
        %746 = vmatpush2.msra.mxu0 0.0
        %747 = vmatprep.subr.mxu0 0.0
        %748 = vmatpush2.msra.mxu0 0.0
        %749 = vmatprep.subr.mxu0 0.0
        %750 = vmatpush2.msra.mxu0 0.0
        %751 = vmatprep.subr.mxu0 0.0
        %752 = vmatpush2.msra.mxu0 0.0
        %753 = vmatprep.subr.mxu0 0.0
        %754 = vmatpush2.msra.mxu0 0.0
        %755 = vmatprep.subr.mxu0 0.0
        %756 = vmatpush2.msra.mxu0 0.0
        %757 = vmatprep.subr.mxu0 0.0
        %758 = vmatpush2.msra.mxu0 0.0
        %759 = vmatprep.subr.mxu0 0.0
        %760 = vmatpush2.msra.mxu0 0.0
        %761 = vmatprep.subr.mxu0 0.0
        %762 = vmatpush2.msra.mxu0 0.0
        %763 = vmatprep.mubr.f32.mxu0 0.0
        %764 = vmatmul.mubr.f32.gmra.mxu0 %v679
        %v765 = vpop.f32.mrf.mxu0
        %v766 = vadd.f32 0.0, %v765
        %v767 = vpop.f32.mrf.mxu0
        %768 = vdwg.mxu0
        %vm769 = vcmask 261120
        %v771 = vsel %vm769, %v766, 0
        %v774 = vsel %vm769, %v680, 0
        %776 = vmatprep.subr.mxu0 0.0
        %777 = vmatpush1.xpose.msra.mxu0 0.0
        %778 = vmatprep.subr.mxu0 0.0
        %779 = vmatpush1.xpose.msra.mxu0 0.0
        %780 = vmatprep.subr.mxu0 0.0
        %781 = vmatpush1.xpose.msra.mxu0 0.0
        %782 = vmatprep.subr.mxu0 0.0
        %783 = vmatpush1.xpose.msra.mxu0 0.0
        %784 = vmatprep.subr.mxu0 0.0
        %785 = vmatpush1.xpose.msra.mxu0 0.0
        %786 = vmatprep.subr.mxu0 0.0
        %787 = vmatpush1.xpose.msra.mxu0 0.0
        %788 = vmatprep.subr.mxu0 0.0
        %789 = vmatpush1.xpose.msra.mxu0 0.0
        %790 = vmatprep.subr.mxu0 0.0
        %791 = vmatpush1.xpose.msra.mxu0 0.0
        %792 = vmatprep.subr.mxu0 0.0
        %793 = vmatpush1.xpose.msra.mxu0 0.0
        %794 = vmatprep.subr.mxu0 0.0
        %795 = vmatpush1.xpose.msra.mxu0 0.0
        %796 = vmatprep.subr.mxu0 0.0
        %797 = vmatpush1.xpose.msra.mxu0 0.0
        %798 = vmatprep.subr.mxu0 0.0
        %799 = vmatpush1.xpose.msra.mxu0 0.0
        %800 = vmatprep.subr.mxu0 0.0
        %801 = vmatpush1.xpose.msra.mxu0 0.0
        %802 = vmatprep.subr.mxu0 0.0
        %803 = vmatpush1.xpose.msra.mxu0 0.0
        %804 = vmatprep.subr.mxu0 0.0
        %805 = vmatpush1.xpose.msra.mxu0 0.0
        %806 = vmatprep.subr.mxu0 0.0
        %807 = vmatpush1.xpose.msra.mxu0 %v774
        %808 = vmatprep.subr.mxu0 0.0
        %809 = vmatpush2.xpose.msra.mxu0 0.0
        %810 = vmatprep.subr.mxu0 0.0
        %811 = vmatpush2.xpose.msra.mxu0 0.0
        %812 = vmatprep.subr.mxu0 0.0
        %813 = vmatpush2.xpose.msra.mxu0 0.0
        %814 = vmatprep.subr.mxu0 0.0
        %815 = vmatpush2.xpose.msra.mxu0 0.0
        %816 = vmatprep.subr.mxu0 0.0
        %817 = vmatpush2.xpose.msra.mxu0 0.0
        %818 = vmatprep.subr.mxu0 0.0
        %819 = vmatpush2.xpose.msra.mxu0 0.0
        %820 = vmatprep.subr.mxu0 0.0
        %821 = vmatpush2.xpose.msra.mxu0 0.0
        %822 = vmatprep.subr.mxu0 0.0
        %823 = vmatpush2.xpose.msra.mxu0 0.0
        %824 = vmatprep.subr.mxu0 0.0
        %825 = vmatpush2.xpose.msra.mxu0 0.0
        %826 = vmatprep.subr.mxu0 0.0
        %827 = vmatpush2.xpose.msra.mxu0 0.0
        %828 = vmatprep.subr.mxu0 0.0
        %829 = vmatpush2.xpose.msra.mxu0 0.0
        %830 = vmatprep.subr.mxu0 0.0
        %831 = vmatpush2.xpose.msra.mxu0 0.0
        %832 = vmatprep.subr.mxu0 0.0
        %833 = vmatpush2.xpose.msra.mxu0 0.0
        %834 = vmatprep.subr.mxu0 0.0
        %835 = vmatpush2.xpose.msra.mxu0 0.0
        %836 = vmatprep.subr.mxu0 0.0
        %837 = vmatpush2.xpose.msra.mxu0 0.0
        %838 = vmatprep.subr.mxu0 0.0
        %839 = vmatpush2.xpose.msra.mxu0 0.0
        %840 = vmatprep.mubr.f32.mxu0 0.0
        %841 = vmatmul.mubr.f32.gmra.mxu0 %v771
        %v842 = vpop.f32.mrf.mxu0
        %v843 = vadd.f32 0.0, %v842
        %v844 = vpop.f32.mrf.mxu0
        %845 = vdwg.mxu0
        %v846 = vmul.f32 %v843, 0.17677669
        %vm847 = vcmp.ne.s32.totalorder %v682, 0
        %v848 = vsel %vm847, -inf, %v846
        %vm849 = vcmask 64512
        %v850 = vsel %vm849, %v848, -inf
        %851 = vmax.xlane.f32.xlu0 %v850
        %v852 = vpop.xlane.xlu0 %851
        %v853 = vsub.f32 %v848, %v852
        %v854 = vmul.f32 %v853, 1.442695
        %v855 = vpow.pop %v854
        %v856 = vsel %vm849, %v855, 0.0
        %857 = vadd.xlane.f32.xlu0 %v856
        %v858 = vpop.xlane.xlu0 %857
        %v859 = vrcp.pop %v858
        %v860 = vmul.f32 %v855, %v859
        %v862 = vsel %vm849, %v860, 0
        %864 = vmatprep.subr.mxu0 0.0
        %865 = vmatpush1.msra.mxu0 0.0
        %866 = vmatprep.subr.mxu0 0.0
        %867 = vmatpush1.msra.mxu0 0.0
        %868 = vmatprep.subr.mxu0 0.0
        %869 = vmatpush1.msra.mxu0 0.0
        %870 = vmatprep.subr.mxu0 0.0
        %871 = vmatpush1.msra.mxu0 0.0
        %872 = vmatprep.subr.mxu0 0.0
        %873 = vmatpush1.msra.mxu0 0.0
        %874 = vmatprep.subr.mxu0 0.0
        %875 = vmatpush1.msra.mxu0 0.0
        %876 = vmatprep.subr.mxu0 0.0
        %877 = vmatpush1.msra.mxu0 0.0
        %878 = vmatprep.subr.mxu0 0.0
        %879 = vmatpush1.msra.mxu0 0.0
        %880 = vmatprep.subr.mxu0 0.0
        %881 = vmatpush1.msra.mxu0 0.0
        %882 = vmatprep.subr.mxu0 0.0
        %883 = vmatpush1.msra.mxu0 0.0
        %884 = vmatprep.subr.mxu0 0.0
        %885 = vmatpush1.msra.mxu0 0.0
        %886 = vmatprep.subr.mxu0 0.0
        %887 = vmatpush1.msra.mxu0 0.0
        %888 = vmatprep.subr.mxu0 0.0
        %889 = vmatpush1.msra.mxu0 0.0
        %890 = vmatprep.subr.mxu0 0.0
        %891 = vmatpush1.msra.mxu0 0.0
        %892 = vmatprep.subr.mxu0 0.0
        %893 = vmatpush1.msra.mxu0 0.0
        %894 = vmatprep.subr.mxu0 0.0
        %895 = vmatpush1.msra.mxu0 %v681
        %896 = vmatprep.subr.mxu0 0.0
        %897 = vmatpush2.msra.mxu0 0.0
        %898 = vmatprep.subr.mxu0 0.0
        %899 = vmatpush2.msra.mxu0 0.0
        %900 = vmatprep.subr.mxu0 0.0
        %901 = vmatpush2.msra.mxu0 0.0
        %902 = vmatprep.subr.mxu0 0.0
        %903 = vmatpush2.msra.mxu0 0.0
        %904 = vmatprep.subr.mxu0 0.0
        %905 = vmatpush2.msra.mxu0 0.0
        %906 = vmatprep.subr.mxu0 0.0
        %907 = vmatpush2.msra.mxu0 0.0
        %908 = vmatprep.subr.mxu0 0.0
        %909 = vmatpush2.msra.mxu0 0.0
        %910 = vmatprep.subr.mxu0 0.0
        %911 = vmatpush2.msra.mxu0 0.0
        %912 = vmatprep.subr.mxu0 0.0
        %913 = vmatpush2.msra.mxu0 0.0
        %914 = vmatprep.subr.mxu0 0.0
        %915 = vmatpush2.msra.mxu0 0.0
        %916 = vmatprep.subr.mxu0 0.0
        %917 = vmatpush2.msra.mxu0 0.0
        %918 = vmatprep.subr.mxu0 0.0
        %919 = vmatpush2.msra.mxu0 0.0
        %920 = vmatprep.subr.mxu0 0.0
        %921 = vmatpush2.msra.mxu0 0.0
        %922 = vmatprep.subr.mxu0 0.0
        %923 = vmatpush2.msra.mxu0 0.0
        %924 = vmatprep.subr.mxu0 0.0
        %925 = vmatpush2.msra.mxu0 0.0
        %926 = vmatprep.subr.mxu0 0.0
        %927 = vmatpush2.msra.mxu0 0.0
        %928 = vmatprep.mubr.f32.mxu0 0.0
        %929 = vmatmul.mubr.f32.gmra.mxu0 %v862
        %v930 = vpop.f32.mrf.mxu0
        %v931 = vadd.f32 0.0, %v930
        %v932 = vpop.f32.mrf.mxu0
        %933 = vdwg.mxu0
        %v934 = vld [vmem:[#allocation10] sm:$0xff]
        %v935 = vld [vmem:[#allocation10 + $0x8] sm:$0xff]
        %v936 = vld [vmem:[#allocation10 + $0x10] sm:$0xff]
        %v937 = vld [vmem:[#allocation10 + $0x18] sm:$0xff]
        %938 = vrot.lane.b32.xlu0 %v766, 96
        %v939 = vpop.permute.xlu0 %938
        %940 = vrot.lane.b32.xlu0 %v680, 96
        %v941 = vpop.permute.xlu0 %940
        %v942 = vsel %vm769, %v939, 0
        %v944 = vsel %vm769, %v941, 0
        %946 = vmatprep.subr.mxu0 0.0
        %947 = vmatpush1.xpose.msra.mxu0 0.0
        %948 = vmatprep.subr.mxu0 0.0
        %949 = vmatpush1.xpose.msra.mxu0 0.0
        %950 = vmatprep.subr.mxu0 0.0
        %951 = vmatpush1.xpose.msra.mxu0 0.0
        %952 = vmatprep.subr.mxu0 0.0
        %953 = vmatpush1.xpose.msra.mxu0 0.0
        %954 = vmatprep.subr.mxu0 0.0
        %955 = vmatpush1.xpose.msra.mxu0 0.0
        %956 = vmatprep.subr.mxu0 0.0
        %957 = vmatpush1.xpose.msra.mxu0 0.0
        %958 = vmatprep.subr.mxu0 0.0
        %959 = vmatpush1.xpose.msra.mxu0 0.0
        %960 = vmatprep.subr.mxu0 0.0
        %961 = vmatpush1.xpose.msra.mxu0 0.0
        %962 = vmatprep.subr.mxu0 0.0
        %963 = vmatpush1.xpose.msra.mxu0 0.0
        %964 = vmatprep.subr.mxu0 0.0
        %965 = vmatpush1.xpose.msra.mxu0 0.0
        %966 = vmatprep.subr.mxu0 0.0
        %967 = vmatpush1.xpose.msra.mxu0 0.0
        %968 = vmatprep.subr.mxu0 0.0
        %969 = vmatpush1.xpose.msra.mxu0 0.0
        %970 = vmatprep.subr.mxu0 0.0
        %971 = vmatpush1.xpose.msra.mxu0 0.0
        %972 = vmatprep.subr.mxu0 0.0
        %973 = vmatpush1.xpose.msra.mxu0 0.0
        %974 = vmatprep.subr.mxu0 0.0
        %975 = vmatpush1.xpose.msra.mxu0 0.0
        %976 = vmatprep.subr.mxu0 0.0
        %977 = vmatpush1.xpose.msra.mxu0 %v944
        %978 = vmatprep.subr.mxu0 0.0
        %979 = vmatpush2.xpose.msra.mxu0 0.0
        %980 = vmatprep.subr.mxu0 0.0
        %981 = vmatpush2.xpose.msra.mxu0 0.0
        %982 = vmatprep.subr.mxu0 0.0
        %983 = vmatpush2.xpose.msra.mxu0 0.0
        %984 = vmatprep.subr.mxu0 0.0
        %985 = vmatpush2.xpose.msra.mxu0 0.0
        %986 = vmatprep.subr.mxu0 0.0
        %987 = vmatpush2.xpose.msra.mxu0 0.0
        %988 = vmatprep.subr.mxu0 0.0
        %989 = vmatpush2.xpose.msra.mxu0 0.0
        %990 = vmatprep.subr.mxu0 0.0
        %991 = vmatpush2.xpose.msra.mxu0 0.0
        %992 = vmatprep.subr.mxu0 0.0
        %993 = vmatpush2.xpose.msra.mxu0 0.0
        %994 = vmatprep.subr.mxu0 0.0
        %995 = vmatpush2.xpose.msra.mxu0 0.0
        %996 = vmatprep.subr.mxu0 0.0
        %997 = vmatpush2.xpose.msra.mxu0 0.0
        %998 = vmatprep.subr.mxu0 0.0
        %999 = vmatpush2.xpose.msra.mxu0 0.0
        %1000 = vmatprep.subr.mxu0 0.0
        %1001 = vmatpush2.xpose.msra.mxu0 0.0
        %1002 = vmatprep.subr.mxu0 0.0
        %1003 = vmatpush2.xpose.msra.mxu0 0.0
        %1004 = vmatprep.subr.mxu0 0.0
        %1005 = vmatpush2.xpose.msra.mxu0 0.0
        %1006 = vmatprep.subr.mxu0 0.0
        %1007 = vmatpush2.xpose.msra.mxu0 0.0
        %1008 = vmatprep.subr.mxu0 0.0
        %1009 = vmatpush2.xpose.msra.mxu0 0.0
        %1010 = vmatprep.mubr.f32.mxu0 0.0
        %1011 = vmatmul.mubr.f32.gmra.mxu0 %v942
        %v1012 = vpop.f32.mrf.mxu0
        %v1013 = vadd.f32 0.0, %v1012
        %v1014 = vpop.f32.mrf.mxu0
        %1015 = vdwg.mxu0
        %v1016 = vmul.f32 %v1013, 0.17677669
        %v1017 = vsel %vm847, -inf, %v1016
        %v1018 = vsel %vm849, %v1017, -inf
        %1019 = vmax.xlane.f32.xlu0 %v1018
        %v1020 = vpop.xlane.xlu0 %1019
        %v1021 = vsub.f32 %v1017, %v1020
        %v1022 = vmul.f32 %v1021, 1.442695
        %v1023 = vpow.pop %v1022
        %v1024 = vsel %vm849, %v1023, 0.0
        %1025 = vadd.xlane.f32.xlu0 %v1024
        %v1026 = vpop.xlane.xlu0 %1025
        %v1027 = vrcp.pop %v1026
        %v1028 = vmul.f32 %v1023, %v1027
        %1030 = vrot.lane.b32.xlu0 %v681, 96
        %v1031 = vpop.permute.xlu0 %1030
        %v1034 = vsel %vm849, %v1028, 0
        %1036 = vmatprep.subr.mxu0 0.0
        %1037 = vmatpush1.msra.mxu0 0.0
        %1038 = vmatprep.subr.mxu0 0.0
        %1039 = vmatpush1.msra.mxu0 0.0
        %1040 = vmatprep.subr.mxu0 0.0
        %1041 = vmatpush1.msra.mxu0 0.0
        %1042 = vmatprep.subr.mxu0 0.0
        %1043 = vmatpush1.msra.mxu0 0.0
        %1044 = vmatprep.subr.mxu0 0.0
        %1045 = vmatpush1.msra.mxu0 0.0
        %1046 = vmatprep.subr.mxu0 0.0
        %1047 = vmatpush1.msra.mxu0 0.0
        %1048 = vmatprep.subr.mxu0 0.0
        %1049 = vmatpush1.msra.mxu0 0.0
        %1050 = vmatprep.subr.mxu0 0.0
        %1051 = vmatpush1.msra.mxu0 0.0
        %1052 = vmatprep.subr.mxu0 0.0
        %1053 = vmatpush1.msra.mxu0 0.0
        %1054 = vmatprep.subr.mxu0 0.0
        %1055 = vmatpush1.msra.mxu0 0.0
        %1056 = vmatprep.subr.mxu0 0.0
        %1057 = vmatpush1.msra.mxu0 0.0
        %1058 = vmatprep.subr.mxu0 0.0
        %1059 = vmatpush1.msra.mxu0 0.0
        %1060 = vmatprep.subr.mxu0 0.0
        %1061 = vmatpush1.msra.mxu0 0.0
        %1062 = vmatprep.subr.mxu0 0.0
        %1063 = vmatpush1.msra.mxu0 0.0
        %1064 = vmatprep.subr.mxu0 0.0
        %1065 = vmatpush1.msra.mxu0 0.0
        %1066 = vmatprep.subr.mxu0 0.0
        %1067 = vmatpush1.msra.mxu0 %v1031
        %1068 = vmatprep.subr.mxu0 0.0
        %1069 = vmatpush2.msra.mxu0 0.0
        %1070 = vmatprep.subr.mxu0 0.0
        %1071 = vmatpush2.msra.mxu0 0.0
        %1072 = vmatprep.subr.mxu0 0.0
        %1073 = vmatpush2.msra.mxu0 0.0
        %1074 = vmatprep.subr.mxu0 0.0
        %1075 = vmatpush2.msra.mxu0 0.0
        %1076 = vmatprep.subr.mxu0 0.0
        %1077 = vmatpush2.msra.mxu0 0.0
        %1078 = vmatprep.subr.mxu0 0.0
        %1079 = vmatpush2.msra.mxu0 0.0
        %1080 = vmatprep.subr.mxu0 0.0
        %1081 = vmatpush2.msra.mxu0 0.0
        %1082 = vmatprep.subr.mxu0 0.0
        %1083 = vmatpush2.msra.mxu0 0.0
        %1084 = vmatprep.subr.mxu0 0.0
        %1085 = vmatpush2.msra.mxu0 0.0
        %1086 = vmatprep.subr.mxu0 0.0
        %1087 = vmatpush2.msra.mxu0 0.0
        %1088 = vmatprep.subr.mxu0 0.0
        %1089 = vmatpush2.msra.mxu0 0.0
        %1090 = vmatprep.subr.mxu0 0.0
        %1091 = vmatpush2.msra.mxu0 0.0
        %1092 = vmatprep.subr.mxu0 0.0
        %1093 = vmatpush2.msra.mxu0 0.0
        %1094 = vmatprep.subr.mxu0 0.0
        %1095 = vmatpush2.msra.mxu0 0.0
        %1096 = vmatprep.subr.mxu0 0.0
        %1097 = vmatpush2.msra.mxu0 0.0
        %1098 = vmatprep.subr.mxu0 0.0
        %1099 = vmatpush2.msra.mxu0 0.0
        %1100 = vmatprep.mubr.f32.mxu0 0.0
        %1101 = vmatmul.mubr.f32.gmra.mxu0 %v1034
        %v1102 = vpop.f32.mrf.mxu0
        %v1103 = vadd.f32 0.0, %v1102
        %v1104 = vpop.f32.mrf.mxu0
        %1105 = vdwg.mxu0
        %v1106 = vld [vmem:[#allocation10 + $0x20] sm:$0xff]
        %v1107 = vld [vmem:[#allocation10 + $0x28] sm:$0xff]
        %v1108 = vld [vmem:[#allocation10 + $0x30] sm:$0xff]
        %v1109 = vld [vmem:[#allocation10 + $0x38] sm:$0xff]
        %v1111 = vsel %vm769, %v1103, 0
        %1113 = vmatprep.subr.mxu0 0.0
        %1114 = vmatpush1.msra.mxu0 0.0
        %1115 = vmatprep.subr.mxu0 0.0
        %1116 = vmatpush1.msra.mxu0 0.0
        %1117 = vmatprep.subr.mxu0 0.0
        %1118 = vmatpush1.msra.mxu0 0.0
        %1119 = vmatprep.subr.mxu0 0.0
        %1120 = vmatpush1.msra.mxu0 0.0
        %1121 = vmatprep.subr.mxu0 0.0
        %1122 = vmatpush1.msra.mxu0 0.0
        %1123 = vmatprep.subr.mxu0 0.0
        %1124 = vmatpush1.msra.mxu0 0.0
        %1125 = vmatprep.subr.mxu0 0.0
        %1126 = vmatpush1.msra.mxu0 0.0
        %1127 = vmatprep.subr.mxu0 0.0
        %1128 = vmatpush1.msra.mxu0 0.0
        %1129 = vmatprep.subr.mxu0 0.0
        %1130 = vmatpush1.msra.mxu0 0.0
        %1131 = vmatprep.subr.mxu0 0.0
        %1132 = vmatpush1.msra.mxu0 0.0
        %1133 = vmatprep.subr.mxu0 0.0
        %1134 = vmatpush1.msra.mxu0 0.0
        %1135 = vmatprep.subr.mxu0 0.0
        %1136 = vmatpush1.msra.mxu0 0.0
        %1137 = vmatprep.subr.mxu0 0.0
        %1138 = vmatpush1.msra.mxu0 %v1109
        %1139 = vmatprep.subr.mxu0 0.0
        %1140 = vmatpush1.msra.mxu0 %v1108
        %1141 = vmatprep.subr.mxu0 0.0
        %1142 = vmatpush1.msra.mxu0 %v1107
        %1143 = vmatprep.subr.mxu0 0.0
        %1144 = vmatpush1.msra.mxu0 %v1106
        %1145 = vmatprep.subr.mxu0 0.0
        %1146 = vmatpush2.msra.mxu0 0.0
        %1147 = vmatprep.subr.mxu0 0.0
        %1148 = vmatpush2.msra.mxu0 0.0
        %1149 = vmatprep.subr.mxu0 0.0
        %1150 = vmatpush2.msra.mxu0 0.0
        %1151 = vmatprep.subr.mxu0 0.0
        %1152 = vmatpush2.msra.mxu0 0.0
        %1153 = vmatprep.subr.mxu0 0.0
        %1154 = vmatpush2.msra.mxu0 0.0
        %1155 = vmatprep.subr.mxu0 0.0
        %1156 = vmatpush2.msra.mxu0 0.0
        %1157 = vmatprep.subr.mxu0 0.0
        %1158 = vmatpush2.msra.mxu0 0.0
        %1159 = vmatprep.subr.mxu0 0.0
        %1160 = vmatpush2.msra.mxu0 0.0
        %1161 = vmatprep.subr.mxu0 0.0
        %1162 = vmatpush2.msra.mxu0 0.0
        %1163 = vmatprep.subr.mxu0 0.0
        %1164 = vmatpush2.msra.mxu0 0.0
        %1165 = vmatprep.subr.mxu0 0.0
        %1166 = vmatpush2.msra.mxu0 0.0
        %1167 = vmatprep.subr.mxu0 0.0
        %1168 = vmatpush2.msra.mxu0 0.0
        %1169 = vmatprep.subr.mxu0 0.0
        %1170 = vmatpush2.msra.mxu0 0.0
        %1171 = vmatprep.subr.mxu0 0.0
        %1172 = vmatpush2.msra.mxu0 0.0
        %1173 = vmatprep.subr.mxu0 0.0
        %1174 = vmatpush2.msra.mxu0 0.0
        %1175 = vmatprep.subr.mxu0 0.0
        %1176 = vmatpush2.msra.mxu0 0.0
        %1177 = vmatprep.mubr.f32.mxu0 0.0
        %1178 = vmatmul.mubr.f32.gmra.mxu0 %v1111
        %v1179 = vpop.f32.mrf.mxu0
        %v1180 = vadd.f32 0.0, %v1179
        %v1181 = vpop.f32.mrf.mxu0
        %1182 = vdwg.mxu0
        %v1184 = vsel %vm769, %v931, 0
        %1186 = vmatprep.subr.mxu0 0.0
        %1187 = vmatpush1.msra.mxu0 0.0
        %1188 = vmatprep.subr.mxu0 0.0
        %1189 = vmatpush1.msra.mxu0 0.0
        %1190 = vmatprep.subr.mxu0 0.0
        %1191 = vmatpush1.msra.mxu0 0.0
        %1192 = vmatprep.subr.mxu0 0.0
        %1193 = vmatpush1.msra.mxu0 0.0
        %1194 = vmatprep.subr.mxu0 0.0
        %1195 = vmatpush1.msra.mxu0 0.0
        %1196 = vmatprep.subr.mxu0 0.0
        %1197 = vmatpush1.msra.mxu0 0.0
        %1198 = vmatprep.subr.mxu0 0.0
        %1199 = vmatpush1.msra.mxu0 0.0
        %1200 = vmatprep.subr.mxu0 0.0
        %1201 = vmatpush1.msra.mxu0 0.0
        %1202 = vmatprep.subr.mxu0 0.0
        %1203 = vmatpush1.msra.mxu0 0.0
        %1204 = vmatprep.subr.mxu0 0.0
        %1205 = vmatpush1.msra.mxu0 0.0
        %1206 = vmatprep.subr.mxu0 0.0
        %1207 = vmatpush1.msra.mxu0 0.0
        %1208 = vmatprep.subr.mxu0 0.0
        %1209 = vmatpush1.msra.mxu0 0.0
        %1210 = vmatprep.subr.mxu0 0.0
        %1211 = vmatpush1.msra.mxu0 %v937
        %1212 = vmatprep.subr.mxu0 0.0
        %1213 = vmatpush1.msra.mxu0 %v936
        %1214 = vmatprep.subr.mxu0 0.0
        %1215 = vmatpush1.msra.mxu0 %v935
        %1216 = vmatprep.subr.mxu0 0.0
        %1217 = vmatpush1.msra.mxu0 %v934
        %1218 = vmatprep.subr.mxu0 0.0
        %1219 = vmatpush2.msra.mxu0 0.0
        %1220 = vmatprep.subr.mxu0 0.0
        %1221 = vmatpush2.msra.mxu0 0.0
        %1222 = vmatprep.subr.mxu0 0.0
        %1223 = vmatpush2.msra.mxu0 0.0
        %1224 = vmatprep.subr.mxu0 0.0
        %1225 = vmatpush2.msra.mxu0 0.0
        %1226 = vmatprep.subr.mxu0 0.0
        %1227 = vmatpush2.msra.mxu0 0.0
        %1228 = vmatprep.subr.mxu0 0.0
        %1229 = vmatpush2.msra.mxu0 0.0
        %1230 = vmatprep.subr.mxu0 0.0
        %1231 = vmatpush2.msra.mxu0 0.0
        %1232 = vmatprep.subr.mxu0 0.0
        %1233 = vmatpush2.msra.mxu0 0.0
        %1234 = vmatprep.subr.mxu0 0.0
        %1235 = vmatpush2.msra.mxu0 0.0
        %1236 = vmatprep.subr.mxu0 0.0
        %1237 = vmatpush2.msra.mxu0 0.0
        %1238 = vmatprep.subr.mxu0 0.0
        %1239 = vmatpush2.msra.mxu0 0.0
        %1240 = vmatprep.subr.mxu0 0.0
        %1241 = vmatpush2.msra.mxu0 0.0
        %1242 = vmatprep.subr.mxu0 0.0
        %1243 = vmatpush2.msra.mxu0 0.0
        %1244 = vmatprep.subr.mxu0 0.0
        %1245 = vmatpush2.msra.mxu0 0.0
        %1246 = vmatprep.subr.mxu0 0.0
        %1247 = vmatpush2.msra.mxu0 0.0
        %1248 = vmatprep.subr.mxu0 0.0
        %1249 = vmatpush2.msra.mxu0 0.0
        %1250 = vmatprep.mubr.f32.mxu0 0.0
        %1251 = vmatmul.mubr.f32.gmra.mxu0 %v1184
        %v1252 = vpop.f32.mrf.mxu0
        %v1253 = vadd.f32 %v1180, %v1252
        %v1254 = vpop.f32.mrf.mxu0
        %1255 = vdwg.mxu0
        %1256 = vrot.lane.b32.xlu0 %v766, 64
        %v1257 = vpop.permute.xlu0 %1256
        %1258 = vrot.lane.b32.xlu0 %v680, 64
        %v1259 = vpop.permute.xlu0 %1258
        %v1260 = vsel %vm769, %v1257, 0
        %v1262 = vsel %vm769, %v1259, 0
        %1264 = vmatprep.subr.mxu0 0.0
        %1265 = vmatpush1.xpose.msra.mxu0 0.0
        %1266 = vmatprep.subr.mxu0 0.0
        %1267 = vmatpush1.xpose.msra.mxu0 0.0
        %1268 = vmatprep.subr.mxu0 0.0
        %1269 = vmatpush1.xpose.msra.mxu0 0.0
        %1270 = vmatprep.subr.mxu0 0.0
        %1271 = vmatpush1.xpose.msra.mxu0 0.0
        %1272 = vmatprep.subr.mxu0 0.0
        %1273 = vmatpush1.xpose.msra.mxu0 0.0
        %1274 = vmatprep.subr.mxu0 0.0
        %1275 = vmatpush1.xpose.msra.mxu0 0.0
        %1276 = vmatprep.subr.mxu0 0.0
        %1277 = vmatpush1.xpose.msra.mxu0 0.0
        %1278 = vmatprep.subr.mxu0 0.0
        %1279 = vmatpush1.xpose.msra.mxu0 0.0
        %1280 = vmatprep.subr.mxu0 0.0
        %1281 = vmatpush1.xpose.msra.mxu0 0.0
        %1282 = vmatprep.subr.mxu0 0.0
        %1283 = vmatpush1.xpose.msra.mxu0 0.0
        %1284 = vmatprep.subr.mxu0 0.0
        %1285 = vmatpush1.xpose.msra.mxu0 0.0
        %1286 = vmatprep.subr.mxu0 0.0
        %1287 = vmatpush1.xpose.msra.mxu0 0.0
        %1288 = vmatprep.subr.mxu0 0.0
        %1289 = vmatpush1.xpose.msra.mxu0 0.0
        %1290 = vmatprep.subr.mxu0 0.0
        %1291 = vmatpush1.xpose.msra.mxu0 0.0
        %1292 = vmatprep.subr.mxu0 0.0
        %1293 = vmatpush1.xpose.msra.mxu0 0.0
        %1294 = vmatprep.subr.mxu0 0.0
        %1295 = vmatpush1.xpose.msra.mxu0 %v1262
        %1296 = vmatprep.subr.mxu0 0.0
        %1297 = vmatpush2.xpose.msra.mxu0 0.0
        %1298 = vmatprep.subr.mxu0 0.0
        %1299 = vmatpush2.xpose.msra.mxu0 0.0
        %1300 = vmatprep.subr.mxu0 0.0
        %1301 = vmatpush2.xpose.msra.mxu0 0.0
        %1302 = vmatprep.subr.mxu0 0.0
        %1303 = vmatpush2.xpose.msra.mxu0 0.0
        %1304 = vmatprep.subr.mxu0 0.0
        %1305 = vmatpush2.xpose.msra.mxu0 0.0
        %1306 = vmatprep.subr.mxu0 0.0
        %1307 = vmatpush2.xpose.msra.mxu0 0.0
        %1308 = vmatprep.subr.mxu0 0.0
        %1309 = vmatpush2.xpose.msra.mxu0 0.0
        %1310 = vmatprep.subr.mxu0 0.0
        %1311 = vmatpush2.xpose.msra.mxu0 0.0
        %1312 = vmatprep.subr.mxu0 0.0
        %1313 = vmatpush2.xpose.msra.mxu0 0.0
        %1314 = vmatprep.subr.mxu0 0.0
        %1315 = vmatpush2.xpose.msra.mxu0 0.0
        %1316 = vmatprep.subr.mxu0 0.0
        %1317 = vmatpush2.xpose.msra.mxu0 0.0
        %1318 = vmatprep.subr.mxu0 0.0
        %1319 = vmatpush2.xpose.msra.mxu0 0.0
        %1320 = vmatprep.subr.mxu0 0.0
        %1321 = vmatpush2.xpose.msra.mxu0 0.0
        %1322 = vmatprep.subr.mxu0 0.0
        %1323 = vmatpush2.xpose.msra.mxu0 0.0
        %1324 = vmatprep.subr.mxu0 0.0
        %1325 = vmatpush2.xpose.msra.mxu0 0.0
        %1326 = vmatprep.subr.mxu0 0.0
        %1327 = vmatpush2.xpose.msra.mxu0 0.0
        %1328 = vmatprep.mubr.f32.mxu0 0.0
        %1329 = vmatmul.mubr.f32.gmra.mxu0 %v1260
        %v1330 = vpop.f32.mrf.mxu0
        %v1331 = vadd.f32 0.0, %v1330
        %v1332 = vpop.f32.mrf.mxu0
        %1333 = vdwg.mxu0
        %v1334 = vmul.f32 %v1331, 0.17677669
        %v1335 = vsel %vm847, -inf, %v1334
        %v1336 = vsel %vm849, %v1335, -inf
        %1337 = vmax.xlane.f32.xlu0 %v1336
        %v1338 = vpop.xlane.xlu0 %1337
        %v1339 = vsub.f32 %v1335, %v1338
        %v1340 = vmul.f32 %v1339, 1.442695
        %v1341 = vpow.pop %v1340
        %v1342 = vsel %vm849, %v1341, 0.0
        %1343 = vadd.xlane.f32.xlu0 %v1342
        %v1344 = vpop.xlane.xlu0 %1343
        %v1345 = vrcp.pop %v1344
        %v1346 = vmul.f32 %v1341, %v1345
        %1347 = vrot.lane.b32.xlu0 %v681, 64
        %v1348 = vpop.permute.xlu0 %1347
        %v1351 = vsel %vm849, %v1346, 0
        %1353 = vmatprep.subr.mxu0 0.0
        %1354 = vmatpush1.msra.mxu0 0.0
        %1355 = vmatprep.subr.mxu0 0.0
        %1356 = vmatpush1.msra.mxu0 0.0
        %1357 = vmatprep.subr.mxu0 0.0
        %1358 = vmatpush1.msra.mxu0 0.0
        %1359 = vmatprep.subr.mxu0 0.0
        %1360 = vmatpush1.msra.mxu0 0.0
        %1361 = vmatprep.subr.mxu0 0.0
        %1362 = vmatpush1.msra.mxu0 0.0
        %1363 = vmatprep.subr.mxu0 0.0
        %1364 = vmatpush1.msra.mxu0 0.0
        %1365 = vmatprep.subr.mxu0 0.0
        %1366 = vmatpush1.msra.mxu0 0.0
        %1367 = vmatprep.subr.mxu0 0.0
        %1368 = vmatpush1.msra.mxu0 0.0
        %1369 = vmatprep.subr.mxu0 0.0
        %1370 = vmatpush1.msra.mxu0 0.0
        %1371 = vmatprep.subr.mxu0 0.0
        %1372 = vmatpush1.msra.mxu0 0.0
        %1373 = vmatprep.subr.mxu0 0.0
        %1374 = vmatpush1.msra.mxu0 0.0
        %1375 = vmatprep.subr.mxu0 0.0
        %1376 = vmatpush1.msra.mxu0 0.0
        %1377 = vmatprep.subr.mxu0 0.0
        %1378 = vmatpush1.msra.mxu0 0.0
        %1379 = vmatprep.subr.mxu0 0.0
        %1380 = vmatpush1.msra.mxu0 0.0
        %1381 = vmatprep.subr.mxu0 0.0
        %1382 = vmatpush1.msra.mxu0 0.0
        %1383 = vmatprep.subr.mxu0 0.0
        %1384 = vmatpush1.msra.mxu0 %v1348
        %1385 = vmatprep.subr.mxu0 0.0
        %1386 = vmatpush2.msra.mxu0 0.0
        %1387 = vmatprep.subr.mxu0 0.0
        %1388 = vmatpush2.msra.mxu0 0.0
        %1389 = vmatprep.subr.mxu0 0.0
        %1390 = vmatpush2.msra.mxu0 0.0
        %1391 = vmatprep.subr.mxu0 0.0
        %1392 = vmatpush2.msra.mxu0 0.0
        %1393 = vmatprep.subr.mxu0 0.0
        %1394 = vmatpush2.msra.mxu0 0.0
        %1395 = vmatprep.subr.mxu0 0.0
        %1396 = vmatpush2.msra.mxu0 0.0
        %1397 = vmatprep.subr.mxu0 0.0
        %1398 = vmatpush2.msra.mxu0 0.0
        %1399 = vmatprep.subr.mxu0 0.0
        %1400 = vmatpush2.msra.mxu0 0.0
        %1401 = vmatprep.subr.mxu0 0.0
        %1402 = vmatpush2.msra.mxu0 0.0
        %1403 = vmatprep.subr.mxu0 0.0
        %1404 = vmatpush2.msra.mxu0 0.0
        %1405 = vmatprep.subr.mxu0 0.0
        %1406 = vmatpush2.msra.mxu0 0.0
        %1407 = vmatprep.subr.mxu0 0.0
        %1408 = vmatpush2.msra.mxu0 0.0
        %1409 = vmatprep.subr.mxu0 0.0
        %1410 = vmatpush2.msra.mxu0 0.0
        %1411 = vmatprep.subr.mxu0 0.0
        %1412 = vmatpush2.msra.mxu0 0.0
        %1413 = vmatprep.subr.mxu0 0.0
        %1414 = vmatpush2.msra.mxu0 0.0
        %1415 = vmatprep.subr.mxu0 0.0
        %1416 = vmatpush2.msra.mxu0 0.0
        %1417 = vmatprep.mubr.f32.mxu0 0.0
        %1418 = vmatmul.mubr.f32.gmra.mxu0 %v1351
        %v1419 = vpop.f32.mrf.mxu0
        %v1420 = vadd.f32 0.0, %v1419
        %v1421 = vpop.f32.mrf.mxu0
        %1422 = vdwg.mxu0
        %v1423 = vld [vmem:[#allocation10 + $0x40] sm:$0xff]
        %v1424 = vld [vmem:[#allocation10 + $0x48] sm:$0xff]
        %v1425 = vld [vmem:[#allocation10 + $0x50] sm:$0xff]
        %v1426 = vld [vmem:[#allocation10 + $0x58] sm:$0xff]
        %v1428 = vsel %vm769, %v1420, 0
        %1430 = vmatprep.subr.mxu0 0.0
        %1431 = vmatpush1.msra.mxu0 0.0
        %1432 = vmatprep.subr.mxu0 0.0
        %1433 = vmatpush1.msra.mxu0 0.0
        %1434 = vmatprep.subr.mxu0 0.0
        %1435 = vmatpush1.msra.mxu0 0.0
        %1436 = vmatprep.subr.mxu0 0.0
        %1437 = vmatpush1.msra.mxu0 0.0
        %1438 = vmatprep.subr.mxu0 0.0
        %1439 = vmatpush1.msra.mxu0 0.0
        %1440 = vmatprep.subr.mxu0 0.0
        %1441 = vmatpush1.msra.mxu0 0.0
        %1442 = vmatprep.subr.mxu0 0.0
        %1443 = vmatpush1.msra.mxu0 0.0
        %1444 = vmatprep.subr.mxu0 0.0
        %1445 = vmatpush1.msra.mxu0 0.0
        %1446 = vmatprep.subr.mxu0 0.0
        %1447 = vmatpush1.msra.mxu0 0.0
        %1448 = vmatprep.subr.mxu0 0.0
        %1449 = vmatpush1.msra.mxu0 0.0
        %1450 = vmatprep.subr.mxu0 0.0
        %1451 = vmatpush1.msra.mxu0 0.0
        %1452 = vmatprep.subr.mxu0 0.0
        %1453 = vmatpush1.msra.mxu0 0.0
        %1454 = vmatprep.subr.mxu0 0.0
        %1455 = vmatpush1.msra.mxu0 %v1426
        %1456 = vmatprep.subr.mxu0 0.0
        %1457 = vmatpush1.msra.mxu0 %v1425
        %1458 = vmatprep.subr.mxu0 0.0
        %1459 = vmatpush1.msra.mxu0 %v1424
        %1460 = vmatprep.subr.mxu0 0.0
        %1461 = vmatpush1.msra.mxu0 %v1423
        %1462 = vmatprep.subr.mxu0 0.0
        %1463 = vmatpush2.msra.mxu0 0.0
        %1464 = vmatprep.subr.mxu0 0.0
        %1465 = vmatpush2.msra.mxu0 0.0
        %1466 = vmatprep.subr.mxu0 0.0
        %1467 = vmatpush2.msra.mxu0 0.0
        %1468 = vmatprep.subr.mxu0 0.0
        %1469 = vmatpush2.msra.mxu0 0.0
        %1470 = vmatprep.subr.mxu0 0.0
        %1471 = vmatpush2.msra.mxu0 0.0
        %1472 = vmatprep.subr.mxu0 0.0
        %1473 = vmatpush2.msra.mxu0 0.0
        %1474 = vmatprep.subr.mxu0 0.0
        %1475 = vmatpush2.msra.mxu0 0.0
        %1476 = vmatprep.subr.mxu0 0.0
        %1477 = vmatpush2.msra.mxu0 0.0
        %1478 = vmatprep.subr.mxu0 0.0
        %1479 = vmatpush2.msra.mxu0 0.0
        %1480 = vmatprep.subr.mxu0 0.0
        %1481 = vmatpush2.msra.mxu0 0.0
        %1482 = vmatprep.subr.mxu0 0.0
        %1483 = vmatpush2.msra.mxu0 0.0
        %1484 = vmatprep.subr.mxu0 0.0
        %1485 = vmatpush2.msra.mxu0 0.0
        %1486 = vmatprep.subr.mxu0 0.0
        %1487 = vmatpush2.msra.mxu0 0.0
        %1488 = vmatprep.subr.mxu0 0.0
        %1489 = vmatpush2.msra.mxu0 0.0
        %1490 = vmatprep.subr.mxu0 0.0
        %1491 = vmatpush2.msra.mxu0 0.0
        %1492 = vmatprep.subr.mxu0 0.0
        %1493 = vmatpush2.msra.mxu0 0.0
        %1494 = vmatprep.mubr.f32.mxu0 0.0
        %1495 = vmatmul.mubr.f32.gmra.mxu0 %v1428
        %v1496 = vpop.f32.mrf.mxu0
        %v1497 = vadd.f32 0.0, %v1496
        %v1498 = vpop.f32.mrf.mxu0
        %1499 = vdwg.mxu0
        %v1500 = vadd.f32 %v1253, %v1497
        %1501 = vrot.lane.b32.xlu0 %v766, 32
        %v1502 = vpop.permute.xlu0 %1501
        %1503 = vrot.lane.b32.xlu0 %v680, 32
        %v1504 = vpop.permute.xlu0 %1503
        %v1505 = vsel %vm769, %v1502, 0
        %v1507 = vsel %vm769, %v1504, 0
        %1509 = vmatprep.subr.mxu0 0.0
        %1510 = vmatpush1.xpose.msra.mxu0 0.0
        %1511 = vmatprep.subr.mxu0 0.0
        %1512 = vmatpush1.xpose.msra.mxu0 0.0
        %1513 = vmatprep.subr.mxu0 0.0
        %1514 = vmatpush1.xpose.msra.mxu0 0.0
        %1515 = vmatprep.subr.mxu0 0.0
        %1516 = vmatpush1.xpose.msra.mxu0 0.0
        %1517 = vmatprep.subr.mxu0 0.0
        %1518 = vmatpush1.xpose.msra.mxu0 0.0
        %1519 = vmatprep.subr.mxu0 0.0
        %1520 = vmatpush1.xpose.msra.mxu0 0.0
        %1521 = vmatprep.subr.mxu0 0.0
        %1522 = vmatpush1.xpose.msra.mxu0 0.0
        %1523 = vmatprep.subr.mxu0 0.0
        %1524 = vmatpush1.xpose.msra.mxu0 0.0
        %1525 = vmatprep.subr.mxu0 0.0
        %1526 = vmatpush1.xpose.msra.mxu0 0.0
        %1527 = vmatprep.subr.mxu0 0.0
        %1528 = vmatpush1.xpose.msra.mxu0 0.0
        %1529 = vmatprep.subr.mxu0 0.0
        %1530 = vmatpush1.xpose.msra.mxu0 0.0
        %1531 = vmatprep.subr.mxu0 0.0
        %1532 = vmatpush1.xpose.msra.mxu0 0.0
        %1533 = vmatprep.subr.mxu0 0.0
        %1534 = vmatpush1.xpose.msra.mxu0 0.0
        %1535 = vmatprep.subr.mxu0 0.0
        %1536 = vmatpush1.xpose.msra.mxu0 0.0
        %1537 = vmatprep.subr.mxu0 0.0
        %1538 = vmatpush1.xpose.msra.mxu0 0.0
        %1539 = vmatprep.subr.mxu0 0.0
        %1540 = vmatpush1.xpose.msra.mxu0 %v1507
        %1541 = vmatprep.subr.mxu0 0.0
        %1542 = vmatpush2.xpose.msra.mxu0 0.0
        %1543 = vmatprep.subr.mxu0 0.0
        %1544 = vmatpush2.xpose.msra.mxu0 0.0
        %1545 = vmatprep.subr.mxu0 0.0
        %1546 = vmatpush2.xpose.msra.mxu0 0.0
        %1547 = vmatprep.subr.mxu0 0.0
        %1548 = vmatpush2.xpose.msra.mxu0 0.0
        %1549 = vmatprep.subr.mxu0 0.0
        %1550 = vmatpush2.xpose.msra.mxu0 0.0
        %1551 = vmatprep.subr.mxu0 0.0
        %1552 = vmatpush2.xpose.msra.mxu0 0.0
        %1553 = vmatprep.subr.mxu0 0.0
        %1554 = vmatpush2.xpose.msra.mxu0 0.0
        %1555 = vmatprep.subr.mxu0 0.0
        %1556 = vmatpush2.xpose.msra.mxu0 0.0
        %1557 = vmatprep.subr.mxu0 0.0
        %1558 = vmatpush2.xpose.msra.mxu0 0.0
        %1559 = vmatprep.subr.mxu0 0.0
        %1560 = vmatpush2.xpose.msra.mxu0 0.0
        %1561 = vmatprep.subr.mxu0 0.0
        %1562 = vmatpush2.xpose.msra.mxu0 0.0
        %1563 = vmatprep.subr.mxu0 0.0
        %1564 = vmatpush2.xpose.msra.mxu0 0.0
        %1565 = vmatprep.subr.mxu0 0.0
        %1566 = vmatpush2.xpose.msra.mxu0 0.0
        %1567 = vmatprep.subr.mxu0 0.0
        %1568 = vmatpush2.xpose.msra.mxu0 0.0
        %1569 = vmatprep.subr.mxu0 0.0
        %1570 = vmatpush2.xpose.msra.mxu0 0.0
        %1571 = vmatprep.subr.mxu0 0.0
        %1572 = vmatpush2.xpose.msra.mxu0 0.0
        %1573 = vmatprep.mubr.f32.mxu0 0.0
        %1574 = vmatmul.mubr.f32.gmra.mxu0 %v1505
        %v1575 = vpop.f32.mrf.mxu0
        %v1576 = vadd.f32 0.0, %v1575
        %v1577 = vpop.f32.mrf.mxu0
        %1578 = vdwg.mxu0
        %v1579 = vmul.f32 %v1576, 0.17677669
        %v1580 = vsel %vm847, -inf, %v1579
        %v1581 = vsel %vm849, %v1580, -inf
        %1582 = vmax.xlane.f32.xlu0 %v1581
        %v1583 = vpop.xlane.xlu0 %1582
        %v1584 = vsub.f32 %v1580, %v1583
        %v1585 = vmul.f32 %v1584, 1.442695
        %v1586 = vpow.pop %v1585
        %v1587 = vsel %vm849, %v1586, 0.0
        %1588 = vadd.xlane.f32.xlu0 %v1587
        %v1589 = vpop.xlane.xlu0 %1588
        %v1590 = vrcp.pop %v1589
        %v1591 = vmul.f32 %v1586, %v1590
        %1592 = vrot.lane.b32.xlu0 %v681, 32
        %v1593 = vpop.permute.xlu0 %1592
        %v1596 = vsel %vm849, %v1591, 0
        %1598 = vmatprep.subr.mxu0 0.0
        %1599 = vmatpush1.msra.mxu0 0.0
        %1600 = vmatprep.subr.mxu0 0.0
        %1601 = vmatpush1.msra.mxu0 0.0
        %1602 = vmatprep.subr.mxu0 0.0
        %1603 = vmatpush1.msra.mxu0 0.0
        %1604 = vmatprep.subr.mxu0 0.0
        %1605 = vmatpush1.msra.mxu0 0.0
        %1606 = vmatprep.subr.mxu0 0.0
        %1607 = vmatpush1.msra.mxu0 0.0
        %1608 = vmatprep.subr.mxu0 0.0
        %1609 = vmatpush1.msra.mxu0 0.0
        %1610 = vmatprep.subr.mxu0 0.0
        %1611 = vmatpush1.msra.mxu0 0.0
        %1612 = vmatprep.subr.mxu0 0.0
        %1613 = vmatpush1.msra.mxu0 0.0
        %1614 = vmatprep.subr.mxu0 0.0
        %1615 = vmatpush1.msra.mxu0 0.0
        %1616 = vmatprep.subr.mxu0 0.0
        %1617 = vmatpush1.msra.mxu0 0.0
        %1618 = vmatprep.subr.mxu0 0.0
        %1619 = vmatpush1.msra.mxu0 0.0
        %1620 = vmatprep.subr.mxu0 0.0
        %1621 = vmatpush1.msra.mxu0 0.0
        %1622 = vmatprep.subr.mxu0 0.0
        %1623 = vmatpush1.msra.mxu0 0.0
        %1624 = vmatprep.subr.mxu0 0.0
        %1625 = vmatpush1.msra.mxu0 0.0
        %1626 = vmatprep.subr.mxu0 0.0
        %1627 = vmatpush1.msra.mxu0 0.0
        %1628 = vmatprep.subr.mxu0 0.0
        %1629 = vmatpush1.msra.mxu0 %v1593
        %1630 = vmatprep.subr.mxu0 0.0
        %1631 = vmatpush2.msra.mxu0 0.0
        %1632 = vmatprep.subr.mxu0 0.0
        %1633 = vmatpush2.msra.mxu0 0.0
        %1634 = vmatprep.subr.mxu0 0.0
        %1635 = vmatpush2.msra.mxu0 0.0
        %1636 = vmatprep.subr.mxu0 0.0
        %1637 = vmatpush2.msra.mxu0 0.0
        %1638 = vmatprep.subr.mxu0 0.0
        %1639 = vmatpush2.msra.mxu0 0.0
        %1640 = vmatprep.subr.mxu0 0.0
        %1641 = vmatpush2.msra.mxu0 0.0
        %1642 = vmatprep.subr.mxu0 0.0
        %1643 = vmatpush2.msra.mxu0 0.0
        %1644 = vmatprep.subr.mxu0 0.0
        %1645 = vmatpush2.msra.mxu0 0.0
        %1646 = vmatprep.subr.mxu0 0.0
        %1647 = vmatpush2.msra.mxu0 0.0
        %1648 = vmatprep.subr.mxu0 0.0
        %1649 = vmatpush2.msra.mxu0 0.0
        %1650 = vmatprep.subr.mxu0 0.0
        %1651 = vmatpush2.msra.mxu0 0.0
        %1652 = vmatprep.subr.mxu0 0.0
        %1653 = vmatpush2.msra.mxu0 0.0
        %1654 = vmatprep.subr.mxu0 0.0
        %1655 = vmatpush2.msra.mxu0 0.0
        %1656 = vmatprep.subr.mxu0 0.0
        %1657 = vmatpush2.msra.mxu0 0.0
        %1658 = vmatprep.subr.mxu0 0.0
        %1659 = vmatpush2.msra.mxu0 0.0
        %1660 = vmatprep.subr.mxu0 0.0
        %1661 = vmatpush2.msra.mxu0 0.0
        %1662 = vmatprep.mubr.f32.mxu0 0.0
        %1663 = vmatmul.mubr.f32.gmra.mxu0 %v1596
        %v1664 = vpop.f32.mrf.mxu0
        %v1665 = vadd.f32 0.0, %v1664
        %v1666 = vpop.f32.mrf.mxu0
        %1667 = vdwg.mxu0
        %v1668 = vld [vmem:[#allocation10 + $0x60] sm:$0xff]
        %v1669 = vld [vmem:[#allocation10 + $0x68] sm:$0xff]
        %v1670 = vld [vmem:[#allocation10 + $0x70] sm:$0xff]
        %v1671 = vld [vmem:[#allocation10 + $0x78] sm:$0xff]
        %v1673 = vsel %vm769, %v1665, 0
        %1675 = vmatprep.subr.mxu0 0.0
        %1676 = vmatpush1.msra.mxu0 0.0
        %1677 = vmatprep.subr.mxu0 0.0
        %1678 = vmatpush1.msra.mxu0 0.0
        %1679 = vmatprep.subr.mxu0 0.0
        %1680 = vmatpush1.msra.mxu0 0.0
        %1681 = vmatprep.subr.mxu0 0.0
        %1682 = vmatpush1.msra.mxu0 0.0
        %1683 = vmatprep.subr.mxu0 0.0
        %1684 = vmatpush1.msra.mxu0 0.0
        %1685 = vmatprep.subr.mxu0 0.0
        %1686 = vmatpush1.msra.mxu0 0.0
        %1687 = vmatprep.subr.mxu0 0.0
        %1688 = vmatpush1.msra.mxu0 0.0
        %1689 = vmatprep.subr.mxu0 0.0
        %1690 = vmatpush1.msra.mxu0 0.0
        %1691 = vmatprep.subr.mxu0 0.0
        %1692 = vmatpush1.msra.mxu0 0.0
        %1693 = vmatprep.subr.mxu0 0.0
        %1694 = vmatpush1.msra.mxu0 0.0
        %1695 = vmatprep.subr.mxu0 0.0
        %1696 = vmatpush1.msra.mxu0 0.0
        %1697 = vmatprep.subr.mxu0 0.0
        %1698 = vmatpush1.msra.mxu0 0.0
        %1699 = vmatprep.subr.mxu0 0.0
        %1700 = vmatpush1.msra.mxu0 %v1671
        %1701 = vmatprep.subr.mxu0 0.0
        %1702 = vmatpush1.msra.mxu0 %v1670
        %1703 = vmatprep.subr.mxu0 0.0
        %1704 = vmatpush1.msra.mxu0 %v1669
        %1705 = vmatprep.subr.mxu0 0.0
        %1706 = vmatpush1.msra.mxu0 %v1668
        %1707 = vmatprep.subr.mxu0 0.0
        %1708 = vmatpush2.msra.mxu0 0.0
        %1709 = vmatprep.subr.mxu0 0.0
        %1710 = vmatpush2.msra.mxu0 0.0
        %1711 = vmatprep.subr.mxu0 0.0
        %1712 = vmatpush2.msra.mxu0 0.0
        %1713 = vmatprep.subr.mxu0 0.0
        %1714 = vmatpush2.msra.mxu0 0.0
        %1715 = vmatprep.subr.mxu0 0.0
        %1716 = vmatpush2.msra.mxu0 0.0
        %1717 = vmatprep.subr.mxu0 0.0
        %1718 = vmatpush2.msra.mxu0 0.0
        %1719 = vmatprep.subr.mxu0 0.0
        %1720 = vmatpush2.msra.mxu0 0.0
        %1721 = vmatprep.subr.mxu0 0.0
        %1722 = vmatpush2.msra.mxu0 0.0
        %1723 = vmatprep.subr.mxu0 0.0
        %1724 = vmatpush2.msra.mxu0 0.0
        %1725 = vmatprep.subr.mxu0 0.0
        %1726 = vmatpush2.msra.mxu0 0.0
        %1727 = vmatprep.subr.mxu0 0.0
        %1728 = vmatpush2.msra.mxu0 0.0
        %1729 = vmatprep.subr.mxu0 0.0
        %1730 = vmatpush2.msra.mxu0 0.0
        %1731 = vmatprep.subr.mxu0 0.0
        %1732 = vmatpush2.msra.mxu0 0.0
        %1733 = vmatprep.subr.mxu0 0.0
        %1734 = vmatpush2.msra.mxu0 0.0
        %1735 = vmatprep.subr.mxu0 0.0
        %1736 = vmatpush2.msra.mxu0 0.0
        %1737 = vmatprep.subr.mxu0 0.0
        %1738 = vmatpush2.msra.mxu0 0.0
        %1739 = vmatprep.mubr.f32.mxu0 0.0
        %1740 = vmatmul.mubr.f32.gmra.mxu0 %v1673
        %v1741 = vpop.f32.mrf.mxu0
        %v1742 = vadd.f32 0.0, %v1741
        %v1743 = vpop.f32.mrf.mxu0
        %1744 = vdwg.mxu0
        %v1745 = vadd.f32 %v1500, %v1742
        %v1746 = vadd.f32 %v679, %v1745
        %v1747 = vld [vmem:[%s6] sm:$0x1]
        %v1748 = vld [vmem:[%s7] sm:$0x1]
        %1749 = vadd.xlane.f32.xlu0 %v1746
        %v1750 = vpop.xlane.xlu0 %1749
        %v1751 = vrcp.pop 128.0
        %v1752 = vmul.f32 %v1750, %v1751
        %v1753 = vsub.f32 %v1746, %v1752
        %v1754 = vmul.f32 %v1753, %v1753
        %1755 = vadd.xlane.f32.xlu0 %v1754
        %v1756 = vpop.xlane.xlu0 %1755
        %v1757 = vrcp.pop 127.0
        %v1758 = vmul.f32 %v1756, %v1757
        %v1759 = vrsqrt.pop %v1758
        %v1760 = vmul.f32 %v1758, %v1759
        %vm1761 = vcmp.eq.f32.partialorder %v1758, inf
        %v1762 = vsel %vm1761, %v1758, %v1760
        %vm1763 = vcmp.eq.f32.partialorder %v1758, 0.0
        %v1764 = vand.u32 %v1758, 2147483648
        %v1765 = vsel %vm1763, %v1764, %v1762
        %v1767 = vlaneseq
        %v1768 = vshrl.u32 %v1767, 7
        %v1769 = vsub.s32 0, %v1768
        %v1770 = vrot.slane %v1747, %v1769
        %v1772 = vmul.f32 %v1770, %v1753
        %v1773 = vadd.f32 %v1765, 1e-06
        %v1774 = vrcp.pop %v1773
        %v1775 = vmul.f32 %v1772, %v1774
        %v1777 = vlaneseq
        %v1778 = vshrl.u32 %v1777, 7
        %v1779 = vsub.s32 0, %v1778
        %v1780 = vrot.slane %v1748, %v1779
        %v1782 = vadd.f32 %v1775, %v1780
        %v1783 = vld [vmem:[#allocation11] sm:$0xff]
        %v1784 = vld [vmem:[#allocation11 + $0x8] sm:$0xff]
        %v1785 = vld [vmem:[#allocation11 + $0x10] sm:$0xff]
        %v1786 = vld [vmem:[#allocation11 + $0x18] sm:$0xff]
        %v1787 = vld [vmem:[#allocation11 + $0x20] sm:$0xff]
        %v1788 = vld [vmem:[#allocation11 + $0x28] sm:$0xff]
        %v1789 = vld [vmem:[#allocation11 + $0x30] sm:$0xff]
        %v1790 = vld [vmem:[#allocation11 + $0x38] sm:$0xff]
        %v1791 = vld [vmem:[#allocation11 + $0x40] sm:$0xff]
        %v1792 = vld [vmem:[#allocation11 + $0x48] sm:$0xff]
        %v1793 = vld [vmem:[#allocation11 + $0x50] sm:$0xff]
        %v1794 = vld [vmem:[#allocation11 + $0x58] sm:$0xff]
        %v1795 = vld [vmem:[#allocation11 + $0x60] sm:$0xff]
        %v1796 = vld [vmem:[#allocation11 + $0x68] sm:$0xff]
        %v1797 = vld [vmem:[#allocation11 + $0x70] sm:$0xff]
        %v1798 = vld [vmem:[#allocation11 + $0x78] sm:$0xff]
        %v1799 = vld [vmem:[#allocation11 + $0x80] sm:$0xff]
        %v1800 = vld [vmem:[#allocation11 + $0x88] sm:$0xff]
        %v1801 = vld [vmem:[#allocation11 + $0x90] sm:$0xff]
        %v1802 = vld [vmem:[#allocation11 + $0x98] sm:$0xff]
        %v1803 = vld [vmem:[#allocation11 + $0xa0] sm:$0xff]
        %v1804 = vld [vmem:[#allocation11 + $0xa8] sm:$0xff]
        %v1805 = vld [vmem:[#allocation11 + $0xb0] sm:$0xff]
        %v1806 = vld [vmem:[#allocation11 + $0xb8] sm:$0xff]
        %v1807 = vld [vmem:[#allocation11 + $0xc0] sm:$0xff]
        %v1808 = vld [vmem:[#allocation11 + $0xc8] sm:$0xff]
        %v1809 = vld [vmem:[#allocation11 + $0xd0] sm:$0xff]
        %v1810 = vld [vmem:[#allocation11 + $0xd8] sm:$0xff]
        %v1811 = vld [vmem:[#allocation11 + $0xe0] sm:$0xff]
        %v1812 = vld [vmem:[#allocation11 + $0xe8] sm:$0xff]
        %v1813 = vld [vmem:[#allocation11 + $0xf0] sm:$0xff]
        %v1814 = vld [vmem:[#allocation11 + $0xf8] sm:$0xff]
        %v1815 = vld [vmem:[#allocation13] sm:$0x3]
        %v1817 = vlaneseq
        %v1818 = vshrl.u32 %v1817, 7
        %v1819 = vsub.s32 0, %v1818
        %v1820 = vrot.slane %v1815, %v1819
        %v1821 = vlaneseq
        %v1822 = vshrl.u32 %v1821, 7
        %v1823 = vsub.s32 1, %v1822
        %v1824 = vrot.slane %v1815, %v1823
        %1827 = vmatprep.subr.mxu0 %v1814
        %1828 = vmatpush1.msra.mxu0 %v1813
        %1829 = vmatprep.subr.mxu0 %v1812
        %1830 = vmatpush1.msra.mxu0 %v1811
        %1831 = vmatprep.subr.mxu0 %v1810
        %1832 = vmatpush1.msra.mxu0 %v1809
        %1833 = vmatprep.subr.mxu0 %v1808
        %1834 = vmatpush1.msra.mxu0 %v1807
        %1835 = vmatprep.subr.mxu0 %v1806
        %1836 = vmatpush1.msra.mxu0 %v1805
        %1837 = vmatprep.subr.mxu0 %v1804
        %1838 = vmatpush1.msra.mxu0 %v1803
        %1839 = vmatprep.subr.mxu0 %v1802
        %1840 = vmatpush1.msra.mxu0 %v1801
        %1841 = vmatprep.subr.mxu0 %v1800
        %1842 = vmatpush1.msra.mxu0 %v1799
        %1843 = vmatprep.subr.mxu0 %v1798
        %1844 = vmatpush1.msra.mxu0 %v1797
        %1845 = vmatprep.subr.mxu0 %v1796
        %1846 = vmatpush1.msra.mxu0 %v1795
        %1847 = vmatprep.subr.mxu0 %v1794
        %1848 = vmatpush1.msra.mxu0 %v1793
        %1849 = vmatprep.subr.mxu0 %v1792
        %1850 = vmatpush1.msra.mxu0 %v1791
        %1851 = vmatprep.subr.mxu0 %v1790
        %1852 = vmatpush1.msra.mxu0 %v1789
        %1853 = vmatprep.subr.mxu0 %v1788
        %1854 = vmatpush1.msra.mxu0 %v1787
        %1855 = vmatprep.subr.mxu0 %v1786
        %1856 = vmatpush1.msra.mxu0 %v1785
        %1857 = vmatprep.subr.mxu0 %v1784
        %1858 = vmatpush1.msra.mxu0 %v1783
        %1859 = vmatprep.subr.mxu0 0.0
        %1860 = vmatpush2.msra.mxu0 0.0
        %1861 = vmatprep.subr.mxu0 0.0
        %1862 = vmatpush2.msra.mxu0 0.0
        %1863 = vmatprep.subr.mxu0 0.0
        %1864 = vmatpush2.msra.mxu0 0.0
        %1865 = vmatprep.subr.mxu0 0.0
        %1866 = vmatpush2.msra.mxu0 0.0
        %1867 = vmatprep.subr.mxu0 0.0
        %1868 = vmatpush2.msra.mxu0 0.0
        %1869 = vmatprep.subr.mxu0 0.0
        %1870 = vmatpush2.msra.mxu0 0.0
        %1871 = vmatprep.subr.mxu0 0.0
        %1872 = vmatpush2.msra.mxu0 0.0
        %1873 = vmatprep.subr.mxu0 0.0
        %1874 = vmatpush2.msra.mxu0 0.0
        %1875 = vmatprep.subr.mxu0 0.0
        %1876 = vmatpush2.msra.mxu0 0.0
        %1877 = vmatprep.subr.mxu0 0.0
        %1878 = vmatpush2.msra.mxu0 0.0
        %1879 = vmatprep.subr.mxu0 0.0
        %1880 = vmatpush2.msra.mxu0 0.0
        %1881 = vmatprep.subr.mxu0 0.0
        %1882 = vmatpush2.msra.mxu0 0.0
        %1883 = vmatprep.subr.mxu0 0.0
        %1884 = vmatpush2.msra.mxu0 0.0
        %1885 = vmatprep.subr.mxu0 0.0
        %1886 = vmatpush2.msra.mxu0 0.0
        %1887 = vmatprep.subr.mxu0 0.0
        %1888 = vmatpush2.msra.mxu0 0.0
        %1889 = vmatprep.subr.mxu0 0.0
        %1890 = vmatpush2.msra.mxu0 0.0
        %1891 = vmatprep.mubr.f32.mxu0 0.0
        %1892 = vmatmul.mubr.f32.gmra.mxu0 %v1782
        %v1893 = vpop.f32.mrf.mxu0
        %v1894 = vadd.f32 %v1820, %v1893
        %v1895 = vpop.f32.mrf.mxu0
        %v1896 = vadd.f32 %v1824, %v1895
        %1897 = vdwg.mxu0
        %v1898 = vmax.f32 %v1894, 0.0
        %v1899 = vmax.f32 %v1896, 0.0
        %v1900 = vld [vmem:[#allocation14] sm:$0xff]
        %v1901 = vld [vmem:[#allocation14 + $0x8] sm:$0xff]
        %v1902 = vld [vmem:[#allocation14 + $0x10] sm:$0xff]
        %v1903 = vld [vmem:[#allocation14 + $0x18] sm:$0xff]
        %v1904 = vld [vmem:[#allocation14 + $0x20] sm:$0xff]
        %v1905 = vld [vmem:[#allocation14 + $0x28] sm:$0xff]
        %v1906 = vld [vmem:[#allocation14 + $0x30] sm:$0xff]
        %v1907 = vld [vmem:[#allocation14 + $0x38] sm:$0xff]
        %v1908 = vld [vmem:[#allocation14 + $0x40] sm:$0xff]
        %v1909 = vld [vmem:[#allocation14 + $0x48] sm:$0xff]
        %v1910 = vld [vmem:[#allocation14 + $0x50] sm:$0xff]
        %v1911 = vld [vmem:[#allocation14 + $0x58] sm:$0xff]
        %v1912 = vld [vmem:[#allocation14 + $0x60] sm:$0xff]
        %v1913 = vld [vmem:[#allocation14 + $0x68] sm:$0xff]
        %v1914 = vld [vmem:[#allocation14 + $0x70] sm:$0xff]
        %v1915 = vld [vmem:[#allocation14 + $0x78] sm:$0xff]
        %v1916 = vld [vmem:[#allocation14 + $0x80] sm:$0xff]
        %v1917 = vld [vmem:[#allocation14 + $0x88] sm:$0xff]
        %v1918 = vld [vmem:[#allocation14 + $0x90] sm:$0xff]
        %v1919 = vld [vmem:[#allocation14 + $0x98] sm:$0xff]
        %v1920 = vld [vmem:[#allocation14 + $0xa0] sm:$0xff]
        %v1921 = vld [vmem:[#allocation14 + $0xa8] sm:$0xff]
        %v1922 = vld [vmem:[#allocation14 + $0xb0] sm:$0xff]
        %v1923 = vld [vmem:[#allocation14 + $0xb8] sm:$0xff]
        %v1924 = vld [vmem:[#allocation14 + $0xc0] sm:$0xff]
        %v1925 = vld [vmem:[#allocation14 + $0xc8] sm:$0xff]
        %v1926 = vld [vmem:[#allocation14 + $0xd0] sm:$0xff]
        %v1927 = vld [vmem:[#allocation14 + $0xd8] sm:$0xff]
        %v1928 = vld [vmem:[#allocation14 + $0xe0] sm:$0xff]
        %v1929 = vld [vmem:[#allocation14 + $0xe8] sm:$0xff]
        %v1930 = vld [vmem:[#allocation14 + $0xf0] sm:$0xff]
        %v1931 = vld [vmem:[#allocation14 + $0xf8] sm:$0xff]
        %v1932 = vld [vmem:[#allocation16] sm:$0x1]
        %v1934 = vlaneseq
        %v1935 = vshrl.u32 %v1934, 7
        %v1936 = vsub.s32 0, %v1935
        %v1937 = vrot.slane %v1932, %v1936
        %1939 = vmatprep.subr.mxu0 0.0
        %1940 = vmatpush1.msra.mxu0 %v1915
        %1941 = vmatprep.subr.mxu0 0.0
        %1942 = vmatpush1.msra.mxu0 %v1914
        %1943 = vmatprep.subr.mxu0 0.0
        %1944 = vmatpush1.msra.mxu0 %v1913
        %1945 = vmatprep.subr.mxu0 0.0
        %1946 = vmatpush1.msra.mxu0 %v1912
        %1947 = vmatprep.subr.mxu0 0.0
        %1948 = vmatpush1.msra.mxu0 %v1911
        %1949 = vmatprep.subr.mxu0 0.0
        %1950 = vmatpush1.msra.mxu0 %v1910
        %1951 = vmatprep.subr.mxu0 0.0
        %1952 = vmatpush1.msra.mxu0 %v1909
        %1953 = vmatprep.subr.mxu0 0.0
        %1954 = vmatpush1.msra.mxu0 %v1908
        %1955 = vmatprep.subr.mxu0 0.0
        %1956 = vmatpush1.msra.mxu0 %v1907
        %1957 = vmatprep.subr.mxu0 0.0
        %1958 = vmatpush1.msra.mxu0 %v1906
        %1959 = vmatprep.subr.mxu0 0.0
        %1960 = vmatpush1.msra.mxu0 %v1905
        %1961 = vmatprep.subr.mxu0 0.0
        %1962 = vmatpush1.msra.mxu0 %v1904
        %1963 = vmatprep.subr.mxu0 0.0
        %1964 = vmatpush1.msra.mxu0 %v1903
        %1965 = vmatprep.subr.mxu0 0.0
        %1966 = vmatpush1.msra.mxu0 %v1902
        %1967 = vmatprep.subr.mxu0 0.0
        %1968 = vmatpush1.msra.mxu0 %v1901
        %1969 = vmatprep.subr.mxu0 0.0
        %1970 = vmatpush1.msra.mxu0 %v1900
        %1971 = vmatprep.subr.mxu0 0.0
        %1972 = vmatpush2.msra.mxu0 %v1931
        %1973 = vmatprep.subr.mxu0 0.0
        %1974 = vmatpush2.msra.mxu0 %v1930
        %1975 = vmatprep.subr.mxu0 0.0
        %1976 = vmatpush2.msra.mxu0 %v1929
        %1977 = vmatprep.subr.mxu0 0.0
        %1978 = vmatpush2.msra.mxu0 %v1928
        %1979 = vmatprep.subr.mxu0 0.0
        %1980 = vmatpush2.msra.mxu0 %v1927
        %1981 = vmatprep.subr.mxu0 0.0
        %1982 = vmatpush2.msra.mxu0 %v1926
        %1983 = vmatprep.subr.mxu0 0.0
        %1984 = vmatpush2.msra.mxu0 %v1925
        %1985 = vmatprep.subr.mxu0 0.0
        %1986 = vmatpush2.msra.mxu0 %v1924
        %1987 = vmatprep.subr.mxu0 0.0
        %1988 = vmatpush2.msra.mxu0 %v1923
        %1989 = vmatprep.subr.mxu0 0.0
        %1990 = vmatpush2.msra.mxu0 %v1922
        %1991 = vmatprep.subr.mxu0 0.0
        %1992 = vmatpush2.msra.mxu0 %v1921
        %1993 = vmatprep.subr.mxu0 0.0
        %1994 = vmatpush2.msra.mxu0 %v1920
        %1995 = vmatprep.subr.mxu0 0.0
        %1996 = vmatpush2.msra.mxu0 %v1919
        %1997 = vmatprep.subr.mxu0 0.0
        %1998 = vmatpush2.msra.mxu0 %v1918
        %1999 = vmatprep.subr.mxu0 0.0
        %2000 = vmatpush2.msra.mxu0 %v1917
        %2001 = vmatprep.subr.mxu0 0.0
        %2002 = vmatpush2.msra.mxu0 %v1916
        %2003 = vmatprep.mubr.f32.mxu0 %v1899
        %2004 = vmatmul.mubr.f32.gmra.mxu0 %v1898
        %v2005 = vpop.f32.mrf.mxu0
        %v2006 = vadd.f32 %v1937, %v2005
        %v2007 = vpop.f32.mrf.mxu0
        %2008 = vdwg.mxu0
        %v2009 = vadd.f32 %v1782, %v2006
        %v2010 = vld [vmem:[#allocation17] sm:$0x1]
        %v2011 = vld [vmem:[#allocation19] sm:$0x1]
        %2012 = vadd.xlane.f32.xlu0 %v2009
        %v2013 = vpop.xlane.xlu0 %2012
        %v2014 = vmul.f32 %v2013, %v1751
        %v2015 = vsub.f32 %v2009, %v2014
        %v2016 = vmul.f32 %v2015, %v2015
        %2017 = vadd.xlane.f32.xlu0 %v2016
        %v2018 = vpop.xlane.xlu0 %2017
        %v2019 = vmul.f32 %v2018, %v1757
        %v2020 = vrsqrt.pop %v2019
        %v2021 = vmul.f32 %v2019, %v2020
        %vm2022 = vcmp.eq.f32.partialorder %v2019, inf
        %v2023 = vsel %vm2022, %v2019, %v2021
        %vm2024 = vcmp.eq.f32.partialorder %v2019, 0.0
        %v2025 = vand.u32 %v2019, 2147483648
        %v2026 = vsel %vm2024, %v2025, %v2023
        %v2028 = vlaneseq
        %v2029 = vshrl.u32 %v2028, 7
        %v2030 = vsub.s32 0, %v2029
        %v2031 = vrot.slane %v2010, %v2030
        %v2033 = vmul.f32 %v2031, %v2015
        %v2034 = vadd.f32 %v2026, 1e-06
        %v2035 = vrcp.pop %v2034
        %v2036 = vmul.f32 %v2033, %v2035
        %v2038 = vlaneseq
        %v2039 = vshrl.u32 %v2038, 7
        %v2040 = vsub.s32 0, %v2039
        %v2041 = vrot.slane %v2011, %v2040
        %v2043 = vadd.f32 %v2036, %v2041
        %2044 = vst [vmem:[%s674] sm:$0xff] %v2043
        %s2045 = sand.u32 %s360, 1
        %s2046 = scalar_lea.sflag [#allocation4], %s2045
        %s2047 = sand.u32 %s360, 1
        %s2048 = smul.addr %s2047, 8
        %s2049 = scalar_lea.vmem [#allocation20], %s2048
        // Predicated region
        $region121: #{encoder_layer_forward.1} parent=75 // pred_check
          %p2050 = pneg %p370
        $region122: #{encoder_layer_forward.1} parent=75 // pred_check_branch
          %2052 = sbr.rel (%p2050) target = $region124
        $region123: #{encoder_layer_forward.1} parent=75 // pred_region
          %s2054 = ssub.s32 128, 128
          %2055 = vsyncadd %s2046, %s2054
          %s2056 = smul.addr %s38, 128
          %s2057 = scalar_lea.hbm %s14, %s2056
          %s2059 = sshll.u32 %s2049, 4
          %s2060 = int_to_ptr.vmem [resolvable:$true] %s2059
          %2062 = dma.vmem_to_hbm [thread:$0]  %s2060, 128, %s2057, %s2046
        $region124: #{encoder_layer_forward.1} parent=75 // pred_fallthru
          _
      $region76: #{encoder_layer_forward.1} parent=5 // pred_fallthru
        _
      %p2063 = scmp.le.s32.totalorder 2, %s33
      // Predicated region
      $region125: #{encoder_layer_forward.1} parent=5 // pred_check
        %p2064 = pneg %p2063
      $region126: #{encoder_layer_forward.1} parent=5 // pred_check_branch
        %2066 = sbr.rel (%p2064) target = $region128
      $region127: #{encoder_layer_forward.1} parent=5 // pred_region
        %s2067 = ssub.s32 %s33, 2
        // Predicated region
        $region129: #{encoder_layer_forward.1} parent=127 // pred_check
          %p2068 = pneg %p376
        $region130: #{encoder_layer_forward.1} parent=127 // pred_check_branch
          %2070 = sbr.rel (%p2068) target = $region132
        $region131: #{encoder_layer_forward.1} parent=127 // pred_region
          %s2071 = sand.u32 %s361, 1
          %s2072 = scalar_lea.sflag [#allocation4], %s2071
          %s2073 = sand.u32 %s361, 1
          %s2074 = smul.addr %s2073, 8
          %s2075 = scalar_lea.vmem [#allocation20], %s2074
          %2076 = dma.done %s2072, 128
        $region132: #{encoder_layer_forward.1} parent=127 // pred_fallthru
          _
      $region128: #{encoder_layer_forward.1} parent=5 // pred_fallthru
        _
    $region6: #{encoder_layer_forward.1} parent=1 // loop_footer
      %s37 = sadd.s32 1, %s33
    $region7: #{encoder_layer_forward.1} parent=1 // loop_footer_branch
      %32 = sbr.rel target = $region3
    $region8: #{encoder_layer_forward.1} parent=1 // loop_exit
      _
    %2077 = vsyncpa [#allocation3], 1
    %s2078 = scalar_lea.sflag [#allocation3], 1
    %2079 = vsyncpa %s2078, 1
    %2080 = vsyncpa [#allocation6], 1
    %s2081 = scalar_lea.sflag [#allocation6], 1
    %2082 = vsyncpa %s2081, 1
    %2083 = vsyncpa [#allocation9], 1
    %2084 = vsyncpa [#allocation12], 1
    %2085 = vsyncpa [#allocation15], 1
    %2086 = vsyncpa [#allocation18], 1
    %2087 = vsyncpa [#allocation4], 1
    %s2088 = scalar_lea.sflag [#allocation4], 1
    %2089 = vsyncpa %s2088, 1

</llo_original>
